<compile_context>
chip_gen: v7x
topology: tpu7x:2x2x1
jax: 0.10.0
libtpu: 0.0.40
codegen_flags: <defaults>
</compile_context>

<pallas_src>
import functools

import jax
import jax.numpy as jnp
from jax.experimental import pallas as pl
from jax.experimental.pallas import tpu as pltpu


# --------------------------------------------------------------------------
# Parameter setup (plain JAX glue)
# --------------------------------------------------------------------------
def _round_up(v, m):
    return ((v + m - 1) // m) * m


def extend_grid(grid, k_extend):
    """pykan-style extend_grid: pad k knots on each side with uniform spacing."""
    h = (grid[:, -1:] - grid[:, :1]) / (grid.shape[1] - 1)
    for _ in range(k_extend):
        grid = jnp.concatenate([grid[:, :1] - h, grid], axis=1)
        grid = jnp.concatenate([grid, grid[:, -1:] + h], axis=1)
    return grid


def init_kan_params(key, in_dim, out_dim, num, k, grid_range=(0.0, 1.0)):
    """Deterministic parameter init mirroring KANLayer.__init__ shapes."""
    base = jnp.linspace(grid_range[0], grid_range[1], num + 1, dtype=jnp.float32)
    grid = jnp.broadcast_to(base[None, :], (in_dim, num + 1))
    grid = extend_grid(grid, k)            # self.grid : (in_dim, num + 1 + 2k)
    # coef has num + 3k entries per spline; a degree-k Cox-de Boor basis with
    # num + 3k functions needs num + 4k + 1 knots, i.e. one more k-extension.
    # TODO(synk): coef2curve_mono's source is not in the provided file; it is
    # implemented here as a standard B-spline evaluation on this further
    # extended knot vector (any extra monotone transform is not reproduced).
    knots = extend_grid(grid, k)           # (in_dim, num + 1 + 4k)
    coef = jnp.abs(
        jax.random.normal(key, (in_dim, out_dim, num + 3 * k), dtype=jnp.float32)
    )
    mask = jnp.ones((in_dim, out_dim), jnp.float32)
    return knots, coef, mask


# --------------------------------------------------------------------------
# Pallas kernel: lane-dense (batch-last) spline-bank evaluation
# --------------------------------------------------------------------------
def _kan_spline_kernel(x_ref, consts_ref, lhs_ref, *out_refs,
                       k, ti, wp, odp, emit_big):
    """One (batch_tile, in_tile) grid step.

    x_ref      : (ti, TB)            inputs for this in-dim tile, batch in lanes
    consts_ref : (crows, 1)          packed knots / reciprocals / mask (see wrapper)
    lhs_ref    : (ti*odp, ti*wp)     block-diagonal spline coefficients
    out_refs   : (ys_ref?, ysum_ref) ys: (ti*odp, TB) lane-dense spline values,
                                     ysum: (odp, TB) resident accumulator over i.
    Basis rows are j-major (row m = j*ti + r), so the Cox-de Boor "j+1" shift is
    a sublane-tile-aligned 8-row shift.
    """
    tb = x_ref.shape[1]
    n = ti * wp

    consts = consts_ref[...]                                   # (crows, 1)

    def cvec(c):                                               # chunk c -> (n, 1)
        return consts[c * n:(c + 1) * n, :]

    x = x_ref[...]                                             # (ti, TB)
    # Replicate x into the j-major row layout (row j*ti + r == x[r]).
    x_big = jnp.concatenate([x] * wp, axis=0)                  # (n, TB)

    # klo is reused at every level -> broadcast once (JAX does not CSE it).
    klo = jnp.broadcast_to(cvec(0), (n, tb))
    khi = cvec(1)

    # Degree-0 basis, half-open intervals (same convention as the reference).
    B = jnp.logical_and(x_big >= klo, x_big < khi).astype(jnp.float32)   # (n, TB)

    zrows = jnp.zeros((ti, tb), jnp.float32)
    for p in range(1, k + 1):
        thi = cvec(2 + 3 * (p - 1))        # knots[j+p+1]
        rl = cvec(3 + 3 * (p - 1))         # 1/(knots[j+p]   - knots[j]),   0 if invalid
        rh = cvec(4 + 3 * (p - 1))         # 1/(knots[j+p+1] - knots[j+1]), 0 if invalid
        # basis-index shift j -> j+1: an 8-row (tile aligned) shift, no relayout.
        b_up = jnp.concatenate([B[ti:, :], zrows], axis=0)
        B = (x_big - klo) * rl * B + (thi - x_big) * rh * b_up

    # Single block-diagonal MXU matmul for the whole in-dim tile.
    ys = jnp.dot(lhs_ref[...], B, preferred_element_type=jnp.float32)    # (ti*odp, TB)

    if emit_big:
        ys_ref, ysum_ref = out_refs
        ys_ref[...] = ys
    else:
        (ysum_ref,) = out_refs

    # Masked reduction over this in-dim tile (mask packed at the tail of consts).
    moff = (3 * k + 2) * n
    masked = ys * consts[moff:moff + ti * odp, :]
    contrib = masked[0:odp, :]
    for r in range(1, ti):
        contrib = contrib + masked[r * odp:(r + 1) * odp, :]

    @pl.when(pl.program_id(1) == 0)
    def _():
        ysum_ref[...] = jnp.zeros_like(ysum_ref)

    ysum_ref[...] += contrib


# --------------------------------------------------------------------------
# Forward wrapper (glue: sort, quirky reorder, padding, final layout)
# --------------------------------------------------------------------------
def kan_layer_forward(x, knots, coef, mask, k, *, tile_batch=512, tile_in=8,
                      return_intermediates=True):
    batch, in_dim = x.shape
    out_dim = coef.shape[1]
    n_knots = knots.shape[1]
    n_basis = coef.shape[2]
    assert n_knots == n_basis + k + 1
    assert tile_in % 8 == 0

    # --- reference preamble: sort every input column independently ---
    sorted_indices = jnp.argsort(x, axis=0)                     # (batch, in_dim)
    x_sorted = jnp.take_along_axis(x, sorted_indices, axis=0)
    preacts = jnp.broadcast_to(x_sorted[:, None, :], (batch, out_dim, in_dim))
    # NOTE: the reference also computes base = Sigmoid(x) and abs()'s
    # scale_sp.data in place, but neither affects any returned value -> skipped.

    # Reference reorder loop: final row j holds y_sorted[i_star(j)], where
    # i_star(j) = max over input columns of the rank of sample j.  Apply the
    # gather to the (cheap) kernel input instead of the big output, and build
    # the ranks with a scatter of an iota instead of a second argsort.
    col = jnp.broadcast_to(jnp.arange(in_dim, dtype=jnp.int32)[None, :], (batch, in_dim))
    ranks = jnp.broadcast_to(jnp.arange(batch, dtype=jnp.int32)[:, None], (batch, in_dim))
    inv = jnp.zeros((batch, in_dim), jnp.int32).at[sorted_indices, col].set(ranks)
    i_star = jnp.max(inv, axis=1)                               # (batch,)
    x_eval = jnp.take(x_sorted, i_star, axis=0)                 # (batch, in_dim)

    # --- tiling / padding ---
    f32 = jnp.float32
    ti = tile_in
    ip = _round_up(in_dim, ti)
    n_it = ip // ti
    odp = _round_up(out_dim, 8)
    wp = _round_up(n_knots - 1, 8)
    n = ti * wp

    bp128 = _round_up(batch, 128)
    tb = min(_round_up(tile_batch, 128), bp128)
    # keep >= 2 batch tiles where possible so the "parallel" axis can shard
    # across both TensorCores on v7x.
    if bp128 >= 256 and bp128 // tb < 2:
        tb = _round_up(-(-bp128 // 2), 128)
    bp = _round_up(batch, tb)

    x_k = jnp.pad(x_eval.T.astype(f32), ((0, ip - in_dim), (0, bp - batch)), mode="edge")
    knots_p = jnp.pad(knots.astype(f32), ((0, ip - in_dim), (0, 0)), mode="edge")
    coef_p = jnp.zeros((ip, odp, wp), f32).at[:in_dim, :out_dim, :n_basis].set(coef)
    mask_p = jnp.zeros((ip, odp), f32).at[:in_dim, :out_dim].set(mask)

    # --- packed per-in-dim constants (one side input -> one DMA per step) ---
    def kshift(s):   # knots[:, s:s+wp], edge-padded on the right
        pad = max(0, s + wp - n_knots)
        a = jnp.pad(knots_p, ((0, 0), (0, pad)), mode="edge")
        return a[:, s:s + wp]

    jj = jnp.arange(wp)
    klo, khi = kshift(0), kshift(1)
    chunks = [klo, khi]
    for p in range(1, k + 1):
        w = n_knots - 1 - p
        thi = kshift(p + 1)
        d_lo = kshift(p) - klo
        d_hi = thi - khi
        valid = (jj < w)[None, :]
        # 0/0 := 0 at repeated knots (standard B-spline convention).
        rl = jnp.where(valid & (d_lo != 0), 1.0 / jnp.where(d_lo == 0, 1.0, d_lo), 0.0)
        rh = jnp.where(valid & (d_hi != 0), 1.0 / jnp.where(d_hi == 0, 1.0, d_hi), 0.0)
        chunks += [thi, rl, rh]

    def jmajor(c):   # (ip, wp) -> (n_it, wp*ti) with row m = j*ti + r
        return c.reshape(n_it, ti, wp).transpose(0, 2, 1).reshape(n_it, n)

    consts = jnp.concatenate(
        [jmajor(c) for c in chunks] + [mask_p.reshape(n_it, ti * odp)], axis=1
    )[:, :, None]
    crows = consts.shape[1]

    # --- block-diagonal coefficients: one (ti*odp, ti*wp) matrix per in-tile ---
    cpt = coef_p.reshape(n_it, ti, odp, wp)
    eye = jnp.eye(ti, dtype=f32)
    lhs = jnp.einsum("trow,rs->trows", cpt, eye).reshape(n_it, ti * odp, n)
    # TODO(synk): for very large out_dim*n_basis, cache the current i-tile's lhs
    # in VMEM scratch (or pipeline batch chunks inside one i step) to avoid the
    # per-batch-tile re-DMA of lhs/consts.

    kernel = functools.partial(_kan_spline_kernel, k=k, ti=ti, wp=wp, odp=odp,
                               emit_big=return_intermediates)
    in_specs = [
        pl.BlockSpec((ti, tb), lambda b, i: (i, b)),
        pl.BlockSpec((None, crows, 1), lambda b, i: (i, 0, 0)),
        pl.BlockSpec((None, ti * odp, n), lambda b, i: (i, 0, 0)),
    ]
    if return_intermediates:
        out_shape = (jax.ShapeDtypeStruct((ip * odp, bp), f32),
                     jax.ShapeDtypeStruct((odp, bp), f32))
        out_specs = (pl.BlockSpec((ti * odp, tb), lambda b, i: (i, b)),
                     pl.BlockSpec((odp, tb), lambda b, i: (0, b)))
    else:
        out_shape = jax.ShapeDtypeStruct((odp, bp), f32)
        out_specs = pl.BlockSpec((odp, tb), lambda b, i: (0, b))

    outs = pl.pallas_call(
        kernel,
        out_shape=out_shape,
        grid=(bp // tb, n_it),
        in_specs=in_specs,
        out_specs=out_specs,
        compiler_params=pltpu.CompilerParams(
            dimension_semantics=("parallel", "arbitrary"),
            vmem_limit_bytes=32 * 1024 * 1024),
    )(x_k, consts, lhs)

    if return_intermediates:
        ys_flat, ysum = outs
        ys = ys_flat.reshape(ip, odp, bp)[:in_dim, :out_dim, :batch]   # (in, out, batch)
        postspline = jnp.transpose(ys, (2, 1, 0))                      # (batch, out, in)
        postacts = mask.T[None, :, :] * postspline                     # (batch, out, in)
    else:
        postspline = postacts = None
    y = ysum[:out_dim, :batch].T                                       # (batch, out)
    return y, preacts, postacts, postspline


# --------------------------------------------------------------------------
# Pure-JAX reference for the spline bank (correctness check only)
# --------------------------------------------------------------------------
def _ref_spline(x_sorted, knots, coef, k):
    """Returns y_sorted of shape (batch, in_dim, out_dim)."""
    xg = x_sorted.T[:, :, None]                                # (in_dim, batch, 1)
    g = knots[:, None, :]                                      # (in_dim, 1, n_knots)
    B = ((xg >= g[:, :, :-1]) & (xg < g[:, :, 1:])).astype(jnp.float32)
    for p in range(1, k + 1):
        B = ((xg - g[:, :, :-(p + 1)]) / (g[:, :, p:-1] - g[:, :, :-(p + 1)]) * B[:, :, :-1]
             + (g[:, :, p + 1:] - xg) / (g[:, :, p + 1:] - g[:, :, 1:-p]) * B[:, :, 1:])
    return jnp.einsum('ibj,ioj->bio', B, coef)                 # (batch, in_dim, out_dim)


# --------------------------------------------------------------------------
if __name__ == "__main__":
    in_dim, out_dim, num, k = 4, 3, 5, 3
    batch = 256                      # auto-split into 2 batch tiles of 128

    key = jax.random.PRNGKey(0)
    kx, kc = jax.random.split(key)
    # grid_range defaults to [0, 1] in this module; sample inputs inside it.
    x = jax.random.uniform(kx, (batch, in_dim), dtype=jnp.float32)

    knots, coef, mask = init_kan_params(kc, in_dim, out_dim, num, k)

    fwd = jax.jit(functools.partial(kan_layer_forward, k=k,
                                    tile_batch=512, tile_in=8))
    y, preacts, postacts, postspline = fwd(x, knots, coef, mask)
    jax.block_until_ready((y, preacts, postacts, postspline))

    # Shape checks.
    assert y.shape == (batch, out_dim)
    assert preacts.shape == (batch, out_dim, in_dim)
    assert postacts.shape == (batch, out_dim, in_dim)
    assert postspline.shape == (batch, out_dim, in_dim)

    # Internal consistency: y == sum over in_dim of masked activations.
    assert bool(jnp.allclose(y, jnp.sum(postacts, axis=2), atol=1e-4))

    # Cross-check kernel spline math against a pure-JAX reference.
    sorted_indices = jnp.argsort(x, axis=0)
    x_sorted = jnp.take_along_axis(x, sorted_indices, axis=0)
    y_sorted_ref = _ref_spline(x_sorted, knots, coef, k)       # (batch, in_dim, out_dim)
    i_star = jnp.max(jnp.argsort(sorted_indices, axis=0), axis=1)
    postspline_ref = jnp.transpose(jnp.take(y_sorted_ref, i_star, axis=0), (0, 2, 1))
    assert bool(jnp.allclose(postspline, postspline_ref, atol=2e-4, rtol=1e-4))

    print("KERNEL_OK")
</pallas_src>

<mosaic_0001>
module attributes {stable_mosaic.version = 11 : i64} {
  func.func @_kan_spline_kernel(%arg0: i32, %arg1: i32, %arg2: memref<8x128xf32, #tpu.memory_space<vmem>>, %arg3: memref<1x2176x1xf32, #tpu.memory_space<vmem>>, %arg4: memref<1x64x192xf32, #tpu.memory_space<vmem>>, %arg5: memref<64x128xf32, #tpu.memory_space<vmem>>, %arg6: memref<8x128xf32, #tpu.memory_space<vmem>>) attributes {dimension_semantics = [#tpu.dimension_semantics<parallel>, #tpu.dimension_semantics<arbitrary>], iteration_bounds = array<i64: 2, 1>, scalar_prefetch = 0 : i64, scratch_operands = 0 : i64, tpu.core_type = #tpu.core_type<tc>, window_params = [{transform_indices = @transform_0, window_bounds = array<i64: 8, 128>}, {transform_indices = @transform_1, window_bounds = array<i64: 1, 2176, 1>}, {transform_indices = @transform_2, window_bounds = array<i64: 1, 64, 192>}, {transform_indices = @transform_3, window_bounds = array<i64: 64, 128>}, {transform_indices = @transform_4, window_bounds = array<i64: 8, 128>}]} {
    %c0 = arith.constant 0 : index
    %c0_0 = arith.constant 0 : index
    %c0_1 = arith.constant 0 : index
    %0 = vector.load %arg3[%c0, %c0_0, %c0_1] : memref<1x2176x1xf32, #tpu.memory_space<vmem>>, vector<1x2176x1xf32>
    %1 = vector.shape_cast %0 : vector<1x2176x1xf32> to vector<2176x1xf32>
    %c0_2 = arith.constant 0 : index
    %c0_3 = arith.constant 0 : index
    %2 = vector.load %arg2[%c0_2, %c0_3] : memref<8x128xf32, #tpu.memory_space<vmem>>, vector<8x128xf32>
    %3 = tpu.concatenate %2, %2, %2, %2, %2, %2, %2, %2, %2, %2, %2, %2, %2, %2, %2, %2 in 0 : vector<8x128xf32>, vector<8x128xf32>, vector<8x128xf32>, vector<8x128xf32>, vector<8x128xf32>, vector<8x128xf32>, vector<8x128xf32>, vector<8x128xf32>, vector<8x128xf32>, vector<8x128xf32>, vector<8x128xf32>, vector<8x128xf32>, vector<8x128xf32>, vector<8x128xf32>, vector<8x128xf32>, vector<8x128xf32> -> vector<128x128xf32>
    %4 = tpu.concatenate %2, %2, %2, %2, %2, %2, %2, %2 in 0 : vector<8x128xf32>, vector<8x128xf32>, vector<8x128xf32>, vector<8x128xf32>, vector<8x128xf32>, vector<8x128xf32>, vector<8x128xf32>, vector<8x128xf32> -> vector<64x128xf32>
    %5 = tpu.concatenate %3, %4 in 0 : vector<128x128xf32>, vector<64x128xf32> -> vector<192x128xf32>
    %6 = vector.extract_strided_slice %1 {offsets = [0, 0], sizes = [192, 1], strides = [1, 1]} : vector<2176x1xf32> to vector<192x1xf32>
    %7 = vector.shape_cast %6 : vector<192x1xf32> to vector<192x1xf32>
    %8 = vector.broadcast %7 : vector<192x1xf32> to vector<192x128xf32>
    %9 = vector.extract_strided_slice %1 {offsets = [192, 0], sizes = [192, 1], strides = [1, 1]} : vector<2176x1xf32> to vector<192x1xf32>
    %10 = arith.cmpf oge, %5, %8 : vector<192x128xf32>
    %11 = vector.broadcast %9 : vector<192x1xf32> to vector<192x128xf32>
    %12 = arith.cmpf olt, %5, %11 : vector<192x128xf32>
    %13 = arith.andi %10, %12 : vector<192x128xi1>
    %14 = arith.extui %13 : vector<192x128xi1> to vector<192x128xi32>
    %15 = arith.sitofp %14 : vector<192x128xi32> to vector<192x128xf32>
    %cst = arith.constant 0.000000e+00 : f32
    %16 = vector.broadcast %cst : f32 to vector<8x128xf32>
    %17 = vector.extract_strided_slice %1 {offsets = [384, 0], sizes = [192, 1], strides = [1, 1]} : vector<2176x1xf32> to vector<192x1xf32>
    %18 = vector.extract_strided_slice %1 {offsets = [576, 0], sizes = [192, 1], strides = [1, 1]} : vector<2176x1xf32> to vector<192x1xf32>
    %19 = vector.extract_strided_slice %1 {offsets = [768, 0], sizes = [192, 1], strides = [1, 1]} : vector<2176x1xf32> to vector<192x1xf32>
    %20 = vector.extract_strided_slice %15 {offsets = [8, 0], sizes = [184, 128], strides = [1, 1]} : vector<192x128xf32> to vector<184x128xf32>
    %21 = tpu.concatenate %20, %16 in 0 : vector<184x128xf32>, vector<8x128xf32> -> vector<192x128xf32>
    %22 = arith.subf %5, %8 : vector<192x128xf32>
    %23 = vector.broadcast %18 : vector<192x1xf32> to vector<192x128xf32>
    %24 = arith.mulf %22, %23 : vector<192x128xf32>
    %25 = arith.mulf %24, %15 : vector<192x128xf32>
    %26 = vector.broadcast %17 : vector<192x1xf32> to vector<192x128xf32>
    %27 = arith.subf %26, %5 : vector<192x128xf32>
    %28 = vector.broadcast %19 : vector<192x1xf32> to vector<192x128xf32>
    %29 = arith.mulf %27, %28 : vector<192x128xf32>
    %30 = arith.mulf %29, %21 : vector<192x128xf32>
    %31 = arith.addf %25, %30 : vector<192x128xf32>
    %32 = vector.extract_strided_slice %1 {offsets = [960, 0], sizes = [192, 1], strides = [1, 1]} : vector<2176x1xf32> to vector<192x1xf32>
    %33 = vector.extract_strided_slice %1 {offsets = [1152, 0], sizes = [192, 1], strides = [1, 1]} : vector<2176x1xf32> to vector<192x1xf32>
    %34 = vector.extract_strided_slice %1 {offsets = [1344, 0], sizes = [192, 1], strides = [1, 1]} : vector<2176x1xf32> to vector<192x1xf32>
    %35 = vector.extract_strided_slice %31 {offsets = [8, 0], sizes = [184, 128], strides = [1, 1]} : vector<192x128xf32> to vector<184x128xf32>
    %36 = tpu.concatenate %35, %16 in 0 : vector<184x128xf32>, vector<8x128xf32> -> vector<192x128xf32>
    %37 = arith.subf %5, %8 : vector<192x128xf32>
    %38 = vector.broadcast %33 : vector<192x1xf32> to vector<192x128xf32>
    %39 = arith.mulf %37, %38 : vector<192x128xf32>
    %40 = arith.mulf %39, %31 : vector<192x128xf32>
    %41 = vector.broadcast %32 : vector<192x1xf32> to vector<192x128xf32>
    %42 = arith.subf %41, %5 : vector<192x128xf32>
    %43 = vector.broadcast %34 : vector<192x1xf32> to vector<192x128xf32>
    %44 = arith.mulf %42, %43 : vector<192x128xf32>
    %45 = arith.mulf %44, %36 : vector<192x128xf32>
    %46 = arith.addf %40, %45 : vector<192x128xf32>
    %47 = vector.extract_strided_slice %1 {offsets = [1536, 0], sizes = [192, 1], strides = [1, 1]} : vector<2176x1xf32> to vector<192x1xf32>
    %48 = vector.extract_strided_slice %1 {offsets = [1728, 0], sizes = [192, 1], strides = [1, 1]} : vector<2176x1xf32> to vector<192x1xf32>
    %49 = vector.extract_strided_slice %1 {offsets = [1920, 0], sizes = [192, 1], strides = [1, 1]} : vector<2176x1xf32> to vector<192x1xf32>
    %50 = vector.extract_strided_slice %46 {offsets = [8, 0], sizes = [184, 128], strides = [1, 1]} : vector<192x128xf32> to vector<184x128xf32>
    %51 = tpu.concatenate %50, %16 in 0 : vector<184x128xf32>, vector<8x128xf32> -> vector<192x128xf32>
    %52 = arith.subf %5, %8 : vector<192x128xf32>
    %53 = vector.broadcast %48 : vector<192x1xf32> to vector<192x128xf32>
    %54 = arith.mulf %52, %53 : vector<192x128xf32>
    %55 = arith.mulf %54, %46 : vector<192x128xf32>
    %56 = vector.broadcast %47 : vector<192x1xf32> to vector<192x128xf32>
    %57 = arith.subf %56, %5 : vector<192x128xf32>
    %58 = vector.broadcast %49 : vector<192x1xf32> to vector<192x128xf32>
    %59 = arith.mulf %57, %58 : vector<192x128xf32>
    %60 = arith.mulf %59, %51 : vector<192x128xf32>
    %61 = arith.addf %55, %60 : vector<192x128xf32>
    %c0_4 = arith.constant 0 : index
    %c0_5 = arith.constant 0 : index
    %c0_6 = arith.constant 0 : index
    %62 = vector.load %arg4[%c0_4, %c0_5, %c0_6] : memref<1x64x192xf32, #tpu.memory_space<vmem>>, vector<1x64x192xf32>
    %63 = vector.shape_cast %62 : vector<1x64x192xf32> to vector<64x192xf32>
    %cst_7 = arith.constant dense<0.000000e+00> : vector<64x128xf32>
    %64 = tpu.matmul %63, %61, %cst_7 {dimension_numbers = #tpu.dot_dimension_numbers<[1], [0], [0], [1], [0, 0, 1, 1], [], []>} : vector<64x192xf32>, vector<192x128xf32>, vector<64x128xf32> -> vector<64x128xf32>
    %c0_8 = arith.constant 0 : index
    %c0_9 = arith.constant 0 : index
    %65 = vector.load %arg5[%c0_8, %c0_9] : memref<64x128xf32, #tpu.memory_space<vmem>>, vector<64x128xf32>
    tpu.vector_store %arg5[%c0_8, %c0_9], %64 {strides = array<i32>} : memref<64x128xf32, #tpu.memory_space<vmem>>, vector<64x128xf32>,
    %66 = vector.extract_strided_slice %1 {offsets = [2112, 0], sizes = [64, 1], strides = [1, 1]} : vector<2176x1xf32> to vector<64x1xf32>
    %67 = vector.broadcast %66 : vector<64x1xf32> to vector<64x128xf32>
    %68 = arith.mulf %64, %67 : vector<64x128xf32>
    %69 = vector.extract_strided_slice %68 {offsets = [0, 0], sizes = [8, 128], strides = [1, 1]} : vector<64x128xf32> to vector<8x128xf32>
    %70 = vector.extract_strided_slice %68 {offsets = [8, 0], sizes = [8, 128], strides = [1, 1]} : vector<64x128xf32> to vector<8x128xf32>
    %71 = arith.addf %69, %70 : vector<8x128xf32>
    %72 = vector.extract_strided_slice %68 {offsets = [16, 0], sizes = [8, 128], strides = [1, 1]} : vector<64x128xf32> to vector<8x128xf32>
    %73 = arith.addf %71, %72 : vector<8x128xf32>
    %74 = vector.extract_strided_slice %68 {offsets = [24, 0], sizes = [8, 128], strides = [1, 1]} : vector<64x128xf32> to vector<8x128xf32>
    %75 = arith.addf %73, %74 : vector<8x128xf32>
    %76 = vector.extract_strided_slice %68 {offsets = [32, 0], sizes = [8, 128], strides = [1, 1]} : vector<64x128xf32> to vector<8x128xf32>
    %77 = arith.addf %75, %76 : vector<8x128xf32>
    %78 = vector.extract_strided_slice %68 {offsets = [40, 0], sizes = [8, 128], strides = [1, 1]} : vector<64x128xf32> to vector<8x128xf32>
    %79 = arith.addf %77, %78 : vector<8x128xf32>
    %80 = vector.extract_strided_slice %68 {offsets = [48, 0], sizes = [8, 128], strides = [1, 1]} : vector<64x128xf32> to vector<8x128xf32>
    %81 = arith.addf %79, %80 : vector<8x128xf32>
    %82 = vector.extract_strided_slice %68 {offsets = [56, 0], sizes = [8, 128], strides = [1, 1]} : vector<64x128xf32> to vector<8x128xf32>
    %83 = arith.addf %81, %82 : vector<8x128xf32>
    %c0_i32 = arith.constant 0 : i32
    %84 = arith.cmpi eq, %arg1, %c0_i32 : i32
    %85 = arith.extui %84 : i1 to i32
    %c0_i32_10 = arith.constant 0 : i32
    %86 = arith.cmpi ne, %85, %c0_i32_10 : i32
    scf.if %86 {
      %cst_15 = arith.constant 0.000000e+00 : f32
      %90 = vector.broadcast %cst_15 : f32 to vector<8x128xf32>
      %c0_16 = arith.constant 0 : index
      %c0_17 = arith.constant 0 : index
      %91 = vector.load %arg6[%c0_16, %c0_17] : memref<8x128xf32, #tpu.memory_space<vmem>>, vector<8x128xf32>
      tpu.vector_store %arg6[%c0_16, %c0_17], %90 {strides = array<i32>} : memref<8x128xf32, #tpu.memory_space<vmem>>, vector<8x128xf32>,
    } else {
    }
    %c0_11 = arith.constant 0 : index
    %c0_12 = arith.constant 0 : index
    %87 = vector.load %arg6[%c0_11, %c0_12] : memref<8x128xf32, #tpu.memory_space<vmem>>, vector<8x128xf32>
    %88 = arith.addf %87, %83 : vector<8x128xf32>
    %c0_13 = arith.constant 0 : index
    %c0_14 = arith.constant 0 : index
    %89 = vector.load %arg6[%c0_13, %c0_14] : memref<8x128xf32, #tpu.memory_space<vmem>>, vector<8x128xf32>
    tpu.vector_store %arg6[%c0_13, %c0_14], %88 {strides = array<i32>} : memref<8x128xf32, #tpu.memory_space<vmem>>, vector<8x128xf32>,
    return
  }
  func.func @transform_0(%arg0: i32, %arg1: i32) -> (i32, i32) {
    %c0_i32 = arith.constant 0 : i32
    return %arg1, %arg0 : i32, i32
  }
  func.func @transform_1(%arg0: i32, %arg1: i32) -> (i32, i32, i32) {
    %c0_i32 = arith.constant 0 : i32
    %c0_i32_0 = arith.constant 0 : i32
    %c0_i32_1 = arith.constant 0 : i32
    return %arg1, %c0_i32, %c0_i32_0 : i32, i32, i32
  }
  func.func @transform_2(%arg0: i32, %arg1: i32) -> (i32, i32, i32) {
    %c0_i32 = arith.constant 0 : i32
    %c0_i32_0 = arith.constant 0 : i32
    %c0_i32_1 = arith.constant 0 : i32
    return %arg1, %c0_i32, %c0_i32_0 : i32, i32, i32
  }
  func.func @transform_3(%arg0: i32, %arg1: i32) -> (i32, i32) {
    %c0_i32 = arith.constant 0 : i32
    return %arg1, %arg0 : i32, i32
  }
  func.func @transform_4(%arg0: i32, %arg1: i32) -> (i32, i32) {
    %c0_i32 = arith.constant 0 : i32
    %c0_i32_0 = arith.constant 0 : i32
    return %c0_i32, %arg0 : i32, i32
  }
}

</mosaic_0001>

<llo_original>
// kernel: kan_layer_forward.1
$region0: #{kan_layer_forward.1}
  #allocation0 [shape = 'u32[]', space=smem, size = 0x4, offset = 0x4, fixed_abs, tag = 'smem constant byte address 0x4 - core index']
  #allocation1 [shape = 'u32[144,128]{1,0:T(1,128)}', space=vmem, size = 0x12000, scoped, tag = 'internal scratch']
  %s0 = inlined_call_operand.vmem [shape: f32[8,256], index: 0, kind: input, shape index: {}]
  %s1 = inlined_call_operand.vmem [shape: f32[1,2176,1], index: 1, kind: input, shape index: {}]
  %s2 = inlined_call_operand.vmem [shape: f32[1,64,192], index: 2, kind: input, shape index: {}]
  %s3 = inlined_call_operand.vmem [shape: f32[64,256], index: 3, kind: output, shape index: {0}]
  %s4 = inlined_call_operand.vmem [shape: f32[8,256], index: 4, kind: output, shape index: {1}]
  %5 = xla_tuple %s3, %s4
  %s6 = sld [smem:[#allocation0]]
  $region91: #{kan_layer_forward.1} parent=0
    _
  %s8 = ssub.s32 1, %s6
  %s9 = scalar_select 0, %s8, %s6
  $region1: #{kan_layer_forward.1} parent=0
    #allocation2 [shape = 'u8[65536]{0}', space=vmem, size = 0x10000, scoped, tag = 'output window, operand 0']
    loop: start=0, step=1, limit=4
    $region2: #{kan_layer_forward.1} parent=1 // loop_pre_header
      _
    $region3: #{kan_layer_forward.1} parent=1 // loop_header
      %s11 = sphi 0, %s15
      %p12 = scmp.ge.s32.totalorder %s11, 4
      %s18 = sphi 0, %s30
      %s19 = sphi 0, %s26
      %s20 = sphi 0, %s18
      %s21 = sphi 0, %s19
      %s22 = sphi 0, %s20
      %s23 = sphi 0, %s21
      %s35 = sphi 0, %s37
      %s38 = sphi 0, %s35
      %s39 = sphi 0, %s38
      %s55 = sphi 0, %s39
      %s61 = sphi 0, %s63
      %s64 = sphi 0, %s61
      %s65 = sphi 0, %s64
      %s81 = sphi 0, %s65
      %s87 = sphi 0, %s89
      %s90 = sphi 0, %s87
      %s91 = sphi 0, %s90
      %s107 = sphi 0, %s91
      %s115 = sphi 0, %s117
      %s118 = sphi 0, %s115
      %s119 = sphi 0, %s118
      %s135 = sphi 0, %s119
      %s141 = sphi 0, %s143
      %s144 = sphi 0, %s141
      %s145 = sphi 0, %s144
      %s161 = sphi 0, %s145
    $region4: #{kan_layer_forward.1} parent=1 // loop_header_branch
      %14 = sbr.rel (%p12) target = $region8
    $region5: #{kan_layer_forward.1} parent=1 // loop_body
      %s16 = ssub.s32 %s11, 1
      %s17 = ssub.s32 %s11, 2
      %s24 = sadd.s32 1, %s19
      %p25 = scmp.ge.s32.totalorder %s24, 1
      %s26 = scalar_select %p25, 0, %s24
      %s27 = sadd.s32 1, %s18
      %s28 = scalar_select %p25, %s27, %s18
      %p29 = scmp.ge.s32.totalorder %s28, 2
      %s30 = scalar_select %p29, 0, %s28
      %s31 = ssub.s32 %s19, %s26
      %s32 = ssub.s32 %s18, %s30
      %s33 = sor.u32 %s31, %s32
      %p34 = scmp.eq.s32.totalorder %s33, 0
      %s36 = sadd.s32 %s35, 1
      %s37 = scalar_select %p34, %s35, %s36
      %p40 = pneg %p34
      %p41 = scmp.eq.s32.totalorder %s11, 1
      %p42 = por %p40, %p41
      %p43 = scmp.ne.s32.totalorder %s35, %s38
      %p44 = scmp.eq.s32.totalorder %s11, 0
      %p45 = por %p43, %p44
      %p46 = scmp.ne.s32.totalorder %s35, %s38
      %p47 = scmp.eq.s32.totalorder %s16, 1
      %p48 = por %p46, %p47
      %p49 = scmp.ne.s32.totalorder %s38, %s39
      %p50 = scmp.eq.s32.totalorder %s16, 0
      %p51 = por %p49, %p50
      %p52 = scmp.ne.s32.totalorder %s38, %s39
      %p53 = scmp.eq.s32.totalorder %s17, 1
      %p54 = por %p52, %p53
      %p56 = scmp.ne.s32.totalorder %s39, %s55
      %p57 = scmp.eq.s32.totalorder %s17, 0
      %p58 = por %p56, %p57
      %s59 = ssub.s32 %s19, %s26
      %p60 = scmp.eq.s32.totalorder %s59, 0
      %s62 = sadd.s32 %s61, 1
      %s63 = scalar_select %p60, %s61, %s62
      %p66 = pneg %p60
      %p67 = scmp.eq.s32.totalorder %s11, 1
      %p68 = por %p66, %p67
      %p69 = scmp.ne.s32.totalorder %s61, %s64
      %p70 = scmp.eq.s32.totalorder %s11, 0
      %p71 = por %p69, %p70
      %p72 = scmp.ne.s32.totalorder %s61, %s64
      %p73 = scmp.eq.s32.totalorder %s16, 1
      %p74 = por %p72, %p73
      %p75 = scmp.ne.s32.totalorder %s64, %s65
      %p76 = scmp.eq.s32.totalorder %s16, 0
      %p77 = por %p75, %p76
      %p78 = scmp.ne.s32.totalorder %s64, %s65
      %p79 = scmp.eq.s32.totalorder %s17, 1
      %p80 = por %p78, %p79
      %p82 = scmp.ne.s32.totalorder %s65, %s81
      %p83 = scmp.eq.s32.totalorder %s17, 0
      %p84 = por %p82, %p83
      %s85 = ssub.s32 %s19, %s26
      %p86 = scmp.eq.s32.totalorder %s85, 0
      %s88 = sadd.s32 %s87, 1
      %s89 = scalar_select %p86, %s87, %s88
      %p92 = pneg %p86
      %p93 = scmp.eq.s32.totalorder %s11, 1
      %p94 = por %p92, %p93
      %p95 = scmp.ne.s32.totalorder %s87, %s90
      %p96 = scmp.eq.s32.totalorder %s11, 0
      %p97 = por %p95, %p96
      %p98 = scmp.ne.s32.totalorder %s87, %s90
      %p99 = scmp.eq.s32.totalorder %s16, 1
      %p100 = por %p98, %p99
      %p101 = scmp.ne.s32.totalorder %s90, %s91
      %p102 = scmp.eq.s32.totalorder %s16, 0
      %p103 = por %p101, %p102
      %p104 = scmp.ne.s32.totalorder %s90, %s91
      %p105 = scmp.eq.s32.totalorder %s17, 1
      %p106 = por %p104, %p105
      %p108 = scmp.ne.s32.totalorder %s91, %s107
      %p109 = scmp.eq.s32.totalorder %s17, 0
      %p110 = por %p108, %p109
      %s111 = ssub.s32 %s19, %s26
      %s112 = ssub.s32 %s18, %s30
      %s113 = sor.u32 %s111, %s112
      %p114 = scmp.eq.s32.totalorder %s113, 0
      %s116 = sadd.s32 %s115, 1
      %s117 = scalar_select %p114, %s115, %s116
      %p120 = pneg %p114
      %p121 = scmp.eq.s32.totalorder %s11, 1
      %p122 = por %p120, %p121
      %p123 = scmp.ne.s32.totalorder %s115, %s118
      %p124 = scmp.eq.s32.totalorder %s11, 0
      %p125 = por %p123, %p124
      %p126 = scmp.ne.s32.totalorder %s115, %s118
      %p127 = scmp.eq.s32.totalorder %s16, 1
      %p128 = por %p126, %p127
      %p129 = scmp.ne.s32.totalorder %s118, %s119
      %p130 = scmp.eq.s32.totalorder %s16, 0
      %p131 = por %p129, %p130
      %p132 = scmp.ne.s32.totalorder %s118, %s119
      %p133 = scmp.eq.s32.totalorder %s17, 1
      %p134 = por %p132, %p133
      %p136 = scmp.ne.s32.totalorder %s119, %s135
      %p137 = scmp.eq.s32.totalorder %s17, 0
      %p138 = por %p136, %p137
      %s139 = ssub.s32 %s18, %s30
      %p140 = scmp.eq.s32.totalorder %s139, 0
      %s142 = sadd.s32 %s141, 1
      %s143 = scalar_select %p140, %s141, %s142
      %p146 = pneg %p140
      %p147 = scmp.eq.s32.totalorder %s11, 1
      %p148 = por %p146, %p147
      %p149 = scmp.ne.s32.totalorder %s141, %s144
      %p150 = scmp.eq.s32.totalorder %s11, 0
      %p151 = por %p149, %p150
      %p152 = scmp.ne.s32.totalorder %s141, %s144
      %p153 = scmp.eq.s32.totalorder %s16, 1
      %p154 = por %p152, %p153
      %p155 = scmp.ne.s32.totalorder %s144, %s145
      %p156 = scmp.eq.s32.totalorder %s16, 0
      %p157 = por %p155, %p156
      %p158 = scmp.ne.s32.totalorder %s144, %s145
      %p159 = scmp.eq.s32.totalorder %s17, 1
      %p160 = por %p158, %p159
      %p162 = scmp.ne.s32.totalorder %s145, %s161
      %p163 = scmp.eq.s32.totalorder %s17, 0
      %p164 = por %p162, %p163
      %p165 = scmp.le.s32.totalorder 1, %s11
      %p166 = scmp.lt.s32.totalorder %s11, 3
      %p167 = pnand %p165, %p166
      %p168 = pneg %p167
      // Predicated region
      $region9: #{kan_layer_forward.1} parent=5 // pred_check
        _
      $region10: #{kan_layer_forward.1} parent=5 // pred_check_branch
        %170 = sbr.rel (%p167) target = $region12
      $region11: #{kan_layer_forward.1} parent=5 // pred_region
        %s171 = ssub.s32 %s11, 1
        // Predicated region
        $region13: #{kan_layer_forward.1} parent=11 // pred_check
          %p172 = pneg %p77
        $region14: #{kan_layer_forward.1} parent=11 // pred_check_branch
          %174 = sbr.rel (%p172) target = $region16
        $region15: #{kan_layer_forward.1} parent=11 // pred_region
          %p175 = scmp.lt.s32.totalorder %s21, 0
          %s176 = scalar_select %p175, %s21, 0
          %s177 = smul.addr %s176, 272
          %s178 = smul.addr %s177, 8
          %s179 = scalar_lea.vmem %s1, %s178
        $region16: #{kan_layer_forward.1} parent=11 // pred_fallthru
          _
        // Predicated region
        $region17: #{kan_layer_forward.1} parent=11 // pred_check
          %p180 = pneg %p103
        $region18: #{kan_layer_forward.1} parent=11 // pred_check_branch
          %182 = sbr.rel (%p180) target = $region20
        $region19: #{kan_layer_forward.1} parent=11 // pred_region
          %p183 = scmp.lt.s32.totalorder %s21, 0
          %s184 = scalar_select %p183, %s21, 0
          %s185 = smul.addr %s184, 16
          %s186 = smul.addr %s185, 8
          %s187 = scalar_lea.vmem %s2, %s186
        $region20: #{kan_layer_forward.1} parent=11 // pred_fallthru
          _
      $region12: #{kan_layer_forward.1} parent=5 // pred_fallthru
        _
      %p188 = scmp.lt.s32.totalorder %s11, 2
      // Predicated region
      $region21: #{kan_layer_forward.1} parent=5 // pred_check
        %p189 = pneg %p188
      $region22: #{kan_layer_forward.1} parent=5 // pred_check_branch
        %191 = sbr.rel (%p189) target = $region24
      $region23: #{kan_layer_forward.1} parent=5 // pred_region
        // Predicated region
        $region25: #{kan_layer_forward.1} parent=23 // pred_check
          %p192 = pneg %p45
        $region26: #{kan_layer_forward.1} parent=23 // pred_check_branch
          %194 = sbr.rel (%p192) target = $region28
        $region27: #{kan_layer_forward.1} parent=23 // pred_region
          %p195 = scmp.lt.s32.totalorder %s19, 0
          %s196 = scalar_select %p195, %s19, 0
          %p197 = scmp.lt.s32.totalorder %s18, 1
          %s198 = scalar_select %p197, %s18, 1
          %s199 = smul.addr %s196, 2
          %s200 = sadd.s32 %s198, %s199
          %s201 = smul.addr %s200, 8
          %s202 = scalar_lea.vmem %s0, %s201
        $region28: #{kan_layer_forward.1} parent=23 // pred_fallthru
          _
      $region24: #{kan_layer_forward.1} parent=5 // pred_fallthru
        _
      %p203 = scmp.le.s32.totalorder 1, %s11
      %p204 = scmp.lt.s32.totalorder %s11, 3
      %p205 = pnand %p203, %p204
      %p206 = pneg %p205
      // Predicated region
      $region29: #{kan_layer_forward.1} parent=5 // pred_check
        _
      $region30: #{kan_layer_forward.1} parent=5 // pred_check_branch
        %208 = sbr.rel (%p205) target = $region32
      $region31: #{kan_layer_forward.1} parent=5 // pred_region
        %s209 = ssub.s32 %s11, 1
        %p210 = scmp.lt.s32.totalorder %s21, 0
        %s211 = scalar_select %p210, %s21, 0
        %p212 = scmp.lt.s32.totalorder %s20, 1
        %s213 = scalar_select %p212, %s20, 1
        %s214 = smul.addr %s211, 2
        %s215 = sadd.s32 %s213, %s214
        %s216 = smul.addr %s215, 8
        %s217 = scalar_lea.vmem %s0, %s216
        %p218 = pneg %p51
        %p219 = pneg %p48
        %p220 = scmp.lt.s32.totalorder %s21, 0
        %s221 = scalar_select %p220, %s21, 0
        %s222 = smul.addr %s221, 272
        %s223 = smul.addr %s222, 8
        %s224 = scalar_lea.vmem %s1, %s223
        %p225 = pneg %p77
        %p226 = pneg %p74
        %p227 = scmp.lt.s32.totalorder %s21, 0
        %s228 = scalar_select %p227, %s21, 0
        %s229 = smul.addr %s228, 16
        %s230 = smul.addr %s229, 8
        %s231 = scalar_lea.vmem %s2, %s230
        %p232 = pneg %p103
        %p233 = pneg %p100
        %p234 = pneg %p131
        %p235 = pneg %p128
        %s236 = sand.u32 %s118, 1
        %s237 = sand.u32 %s118, 1
        %s238 = smul.addr %s237, 64
        %s239 = scalar_lea.vmem [#allocation2], %s238
        %p240 = pneg %p157
        %p241 = pneg %p154
        %p242 = scmp.lt.s32.totalorder %s20, 1
        %s243 = scalar_select %p242, %s20, 1
        %s244 = smul.addr %s243, 8
        %s245 = scalar_lea.vmem %s4, %s244
        %p246 = scmp.lt.s32.totalorder %s21, 0
        %s247 = scalar_select %p246, %s21, 0
        %p248 = scmp.lt.s32.totalorder %s20, 1
        %s249 = scalar_select %p248, %s20, 1
        %s250 = smul.addr %s247, 2
        %s251 = sadd.s32 %s249, %s250
        %s252 = smul.addr %s251, 8
        %s253 = scalar_lea.vmem %s0, %s252
        %p254 = scmp.lt.s32.totalorder %s21, 0
        %s255 = scalar_select %p254, %s21, 0
        %s256 = smul.addr %s255, 272
        %s257 = smul.addr %s256, 8
        %s258 = scalar_lea.vmem %s1, %s257
        %p259 = scmp.lt.s32.totalorder %s21, 0
        %s260 = scalar_select %p259, %s21, 0
        %s261 = smul.addr %s260, 16
        %s262 = smul.addr %s261, 8
        %s263 = scalar_lea.vmem %s2, %s262
        %s264 = smul.u32 8, %s21
        %p265 = scmp.lt.s32.totalorder %s20, 1
        %s266 = scalar_select %p265, %s20, 1
        %s267 = smul.addr %s266, 8
        %s268 = scalar_lea.vmem %s4, %s267
        %v269 = vld [vmem:[%s258] sm:$0xff]
        %v270 = vld [vmem:[%s258 + $0x8] sm:$0xff]
        %v271 = vld [vmem:[%s258 + $0x10] sm:$0xff]
        %v272 = vld [vmem:[%s258 + $0x18] sm:$0xff]
        %v273 = vld [vmem:[%s258 + $0x20] sm:$0xff]
        %v274 = vld [vmem:[%s258 + $0x28] sm:$0xff]
        %v275 = vld [vmem:[%s258 + $0x30] sm:$0xff]
        %v276 = vld [vmem:[%s258 + $0x38] sm:$0xff]
        %v277 = vld [vmem:[%s258 + $0x40] sm:$0xff]
        %v278 = vld [vmem:[%s258 + $0x48] sm:$0xff]
        %v279 = vld [vmem:[%s258 + $0x50] sm:$0xff]
        %v280 = vld [vmem:[%s258 + $0x58] sm:$0xff]
        %v281 = vld [vmem:[%s258 + $0x60] sm:$0xff]
        %v282 = vld [vmem:[%s258 + $0x68] sm:$0xff]
        %v283 = vld [vmem:[%s258 + $0x70] sm:$0xff]
        %v284 = vld [vmem:[%s258 + $0x78] sm:$0xff]
        %v285 = vld [vmem:[%s258 + $0x80] sm:$0xff]
        %v286 = vld [vmem:[%s258 + $0x88] sm:$0xff]
        %v287 = vld [vmem:[%s258 + $0x90] sm:$0xff]
        %v288 = vld [vmem:[%s258 + $0x98] sm:$0xff]
        %v289 = vld [vmem:[%s258 + $0xa0] sm:$0xff]
        %v290 = vld [vmem:[%s258 + $0xa8] sm:$0xff]
        %v291 = vld [vmem:[%s258 + $0xb0] sm:$0xff]
        %v292 = vld [vmem:[%s258 + $0xb8] sm:$0xff]
        %v293 = vld [vmem:[%s258 + $0xc0] sm:$0xff]
        %v294 = vld [vmem:[%s258 + $0xc8] sm:$0xff]
        %v295 = vld [vmem:[%s258 + $0xd0] sm:$0xff]
        %v296 = vld [vmem:[%s258 + $0xd8] sm:$0xff]
        %v297 = vld [vmem:[%s258 + $0xe0] sm:$0xff]
        %v298 = vld [vmem:[%s258 + $0xe8] sm:$0xff]
        %v299 = vld [vmem:[%s258 + $0xf0] sm:$0xff]
        %v300 = vld [vmem:[%s258 + $0xf8] sm:$0xff]
        %v301 = vld [vmem:[%s258 + $0x100] sm:$0xff]
        %v302 = vld [vmem:[%s258 + $0x108] sm:$0xff]
        %v303 = vld [vmem:[%s258 + $0x110] sm:$0xff]
        %v304 = vld [vmem:[%s258 + $0x118] sm:$0xff]
        %v305 = vld [vmem:[%s258 + $0x120] sm:$0xff]
        %v306 = vld [vmem:[%s258 + $0x128] sm:$0xff]
        %v307 = vld [vmem:[%s258 + $0x130] sm:$0xff]
        %v308 = vld [vmem:[%s258 + $0x138] sm:$0xff]
        %v309 = vld [vmem:[%s258 + $0x140] sm:$0xff]
        %v310 = vld [vmem:[%s258 + $0x148] sm:$0xff]
        %v311 = vld [vmem:[%s258 + $0x150] sm:$0xff]
        %v312 = vld [vmem:[%s258 + $0x158] sm:$0xff]
        %v313 = vld [vmem:[%s258 + $0x160] sm:$0xff]
        %v314 = vld [vmem:[%s258 + $0x168] sm:$0xff]
        %v315 = vld [vmem:[%s258 + $0x170] sm:$0xff]
        %v316 = vld [vmem:[%s258 + $0x178] sm:$0xff]
        %v317 = vld [vmem:[%s258 + $0x180] sm:$0xff]
        %v318 = vld [vmem:[%s258 + $0x188] sm:$0xff]
        %v319 = vld [vmem:[%s258 + $0x190] sm:$0xff]
        %v320 = vld [vmem:[%s258 + $0x198] sm:$0xff]
        %v321 = vld [vmem:[%s258 + $0x1a0] sm:$0xff]
        %v322 = vld [vmem:[%s258 + $0x1a8] sm:$0xff]
        %v323 = vld [vmem:[%s258 + $0x1b0] sm:$0xff]
        %v324 = vld [vmem:[%s258 + $0x1b8] sm:$0xff]
        %v325 = vld [vmem:[%s258 + $0x1c0] sm:$0xff]
        %v326 = vld [vmem:[%s258 + $0x1c8] sm:$0xff]
        %v327 = vld [vmem:[%s258 + $0x1d0] sm:$0xff]
        %v328 = vld [vmem:[%s258 + $0x1d8] sm:$0xff]
        %v329 = vld [vmem:[%s258 + $0x1e0] sm:$0xff]
        %v330 = vld [vmem:[%s258 + $0x1e8] sm:$0xff]
        %v331 = vld [vmem:[%s258 + $0x1f0] sm:$0xff]
        %v332 = vld [vmem:[%s258 + $0x1f8] sm:$0xff]
        %v333 = vld [vmem:[%s258 + $0x200] sm:$0xff]
        %v334 = vld [vmem:[%s258 + $0x208] sm:$0xff]
        %v335 = vld [vmem:[%s258 + $0x210] sm:$0xff]
        %v336 = vld [vmem:[%s258 + $0x218] sm:$0xff]
        %v337 = vld [vmem:[%s258 + $0x220] sm:$0xff]
        %v338 = vld [vmem:[%s258 + $0x228] sm:$0xff]
        %v339 = vld [vmem:[%s258 + $0x230] sm:$0xff]
        %v340 = vld [vmem:[%s258 + $0x238] sm:$0xff]
        %v341 = vld [vmem:[%s258 + $0x240] sm:$0xff]
        %v342 = vld [vmem:[%s258 + $0x248] sm:$0xff]
        %v343 = vld [vmem:[%s258 + $0x250] sm:$0xff]
        %v344 = vld [vmem:[%s258 + $0x258] sm:$0xff]
        %v345 = vld [vmem:[%s258 + $0x260] sm:$0xff]
        %v346 = vld [vmem:[%s258 + $0x268] sm:$0xff]
        %v347 = vld [vmem:[%s258 + $0x270] sm:$0xff]
        %v348 = vld [vmem:[%s258 + $0x278] sm:$0xff]
        %v349 = vld [vmem:[%s258 + $0x280] sm:$0xff]
        %v350 = vld [vmem:[%s258 + $0x288] sm:$0xff]
        %v351 = vld [vmem:[%s258 + $0x290] sm:$0xff]
        %v352 = vld [vmem:[%s258 + $0x298] sm:$0xff]
        %v353 = vld [vmem:[%s258 + $0x2a0] sm:$0xff]
        %v354 = vld [vmem:[%s258 + $0x2a8] sm:$0xff]
        %v355 = vld [vmem:[%s258 + $0x2b0] sm:$0xff]
        %v356 = vld [vmem:[%s258 + $0x2b8] sm:$0xff]
        %v357 = vld [vmem:[%s258 + $0x2c0] sm:$0xff]
        %v358 = vld [vmem:[%s258 + $0x2c8] sm:$0xff]
        %v359 = vld [vmem:[%s258 + $0x2d0] sm:$0xff]
        %v360 = vld [vmem:[%s258 + $0x2d8] sm:$0xff]
        %v361 = vld [vmem:[%s258 + $0x2e0] sm:$0xff]
        %v362 = vld [vmem:[%s258 + $0x2e8] sm:$0xff]
        %v363 = vld [vmem:[%s258 + $0x2f0] sm:$0xff]
        %v364 = vld [vmem:[%s258 + $0x2f8] sm:$0xff]
        %v365 = vld [vmem:[%s258 + $0x300] sm:$0xff]
        %v366 = vld [vmem:[%s258 + $0x308] sm:$0xff]
        %v367 = vld [vmem:[%s258 + $0x310] sm:$0xff]
        %v368 = vld [vmem:[%s258 + $0x318] sm:$0xff]
        %v369 = vld [vmem:[%s258 + $0x320] sm:$0xff]
        %v370 = vld [vmem:[%s258 + $0x328] sm:$0xff]
        %v371 = vld [vmem:[%s258 + $0x330] sm:$0xff]
        %v372 = vld [vmem:[%s258 + $0x338] sm:$0xff]
        %v373 = vld [vmem:[%s258 + $0x340] sm:$0xff]
        %v374 = vld [vmem:[%s258 + $0x348] sm:$0xff]
        %v375 = vld [vmem:[%s258 + $0x350] sm:$0xff]
        %v376 = vld [vmem:[%s258 + $0x358] sm:$0xff]
        %v377 = vld [vmem:[%s258 + $0x360] sm:$0xff]
        %v378 = vld [vmem:[%s258 + $0x368] sm:$0xff]
        %v379 = vld [vmem:[%s258 + $0x370] sm:$0xff]
        %v380 = vld [vmem:[%s258 + $0x378] sm:$0xff]
        %v381 = vld [vmem:[%s258 + $0x380] sm:$0xff]
        %v382 = vld [vmem:[%s258 + $0x388] sm:$0xff]
        %v383 = vld [vmem:[%s258 + $0x390] sm:$0xff]
        %v384 = vld [vmem:[%s258 + $0x398] sm:$0xff]
        %v385 = vld [vmem:[%s258 + $0x3a0] sm:$0xff]
        %v386 = vld [vmem:[%s258 + $0x3a8] sm:$0xff]
        %v387 = vld [vmem:[%s258 + $0x3b0] sm:$0xff]
        %v388 = vld [vmem:[%s258 + $0x3b8] sm:$0xff]
        %v389 = vld [vmem:[%s258 + $0x3c0] sm:$0xff]
        %v390 = vld [vmem:[%s258 + $0x3c8] sm:$0xff]
        %v391 = vld [vmem:[%s258 + $0x3d0] sm:$0xff]
        %v392 = vld [vmem:[%s258 + $0x3d8] sm:$0xff]
        %v393 = vld [vmem:[%s258 + $0x3e0] sm:$0xff]
        %v394 = vld [vmem:[%s258 + $0x3e8] sm:$0xff]
        %v395 = vld [vmem:[%s258 + $0x3f0] sm:$0xff]
        %v396 = vld [vmem:[%s258 + $0x3f8] sm:$0xff]
        %v397 = vld [vmem:[%s258 + $0x400] sm:$0xff]
        %v398 = vld [vmem:[%s258 + $0x408] sm:$0xff]
        %v399 = vld [vmem:[%s258 + $0x410] sm:$0xff]
        %v400 = vld [vmem:[%s258 + $0x418] sm:$0xff]
        %v401 = vld [vmem:[%s258 + $0x420] sm:$0xff]
        %v402 = vld [vmem:[%s258 + $0x428] sm:$0xff]
        %v403 = vld [vmem:[%s258 + $0x430] sm:$0xff]
        %v404 = vld [vmem:[%s258 + $0x438] sm:$0xff]
        %v405 = vld [vmem:[%s258 + $0x440] sm:$0xff]
        %v406 = vld [vmem:[%s258 + $0x448] sm:$0xff]
        %v407 = vld [vmem:[%s258 + $0x450] sm:$0xff]
        %v408 = vld [vmem:[%s258 + $0x458] sm:$0xff]
        %v409 = vld [vmem:[%s258 + $0x460] sm:$0xff]
        %v410 = vld [vmem:[%s258 + $0x468] sm:$0xff]
        %v411 = vld [vmem:[%s258 + $0x470] sm:$0xff]
        %v412 = vld [vmem:[%s258 + $0x478] sm:$0xff]
        %v413 = vld [vmem:[%s258 + $0x480] sm:$0xff]
        %v414 = vld [vmem:[%s258 + $0x488] sm:$0xff]
        %v415 = vld [vmem:[%s258 + $0x490] sm:$0xff]
        %v416 = vld [vmem:[%s258 + $0x498] sm:$0xff]
        %v417 = vld [vmem:[%s258 + $0x4a0] sm:$0xff]
        %v418 = vld [vmem:[%s258 + $0x4a8] sm:$0xff]
        %v419 = vld [vmem:[%s258 + $0x4b0] sm:$0xff]
        %v420 = vld [vmem:[%s258 + $0x4b8] sm:$0xff]
        %v421 = vld [vmem:[%s258 + $0x4c0] sm:$0xff]
        %v422 = vld [vmem:[%s258 + $0x4c8] sm:$0xff]
        %v423 = vld [vmem:[%s258 + $0x4d0] sm:$0xff]
        %v424 = vld [vmem:[%s258 + $0x4d8] sm:$0xff]
        %v425 = vld [vmem:[%s258 + $0x4e0] sm:$0xff]
        %v426 = vld [vmem:[%s258 + $0x4e8] sm:$0xff]
        %v427 = vld [vmem:[%s258 + $0x4f0] sm:$0xff]
        %v428 = vld [vmem:[%s258 + $0x4f8] sm:$0xff]
        %v429 = vld [vmem:[%s258 + $0x500] sm:$0xff]
        %v430 = vld [vmem:[%s258 + $0x508] sm:$0xff]
        %v431 = vld [vmem:[%s258 + $0x510] sm:$0xff]
        %v432 = vld [vmem:[%s258 + $0x518] sm:$0xff]
        %v433 = vld [vmem:[%s258 + $0x520] sm:$0xff]
        %v434 = vld [vmem:[%s258 + $0x528] sm:$0xff]
        %v435 = vld [vmem:[%s258 + $0x530] sm:$0xff]
        %v436 = vld [vmem:[%s258 + $0x538] sm:$0xff]
        %v437 = vld [vmem:[%s258 + $0x540] sm:$0xff]
        %v438 = vld [vmem:[%s258 + $0x548] sm:$0xff]
        %v439 = vld [vmem:[%s258 + $0x550] sm:$0xff]
        %v440 = vld [vmem:[%s258 + $0x558] sm:$0xff]
        %v441 = vld [vmem:[%s258 + $0x560] sm:$0xff]
        %v442 = vld [vmem:[%s258 + $0x568] sm:$0xff]
        %v443 = vld [vmem:[%s258 + $0x570] sm:$0xff]
        %v444 = vld [vmem:[%s258 + $0x578] sm:$0xff]
        %v445 = vld [vmem:[%s258 + $0x580] sm:$0xff]
        %v446 = vld [vmem:[%s258 + $0x588] sm:$0xff]
        %v447 = vld [vmem:[%s258 + $0x590] sm:$0xff]
        %v448 = vld [vmem:[%s258 + $0x598] sm:$0xff]
        %v449 = vld [vmem:[%s258 + $0x5a0] sm:$0xff]
        %v450 = vld [vmem:[%s258 + $0x5a8] sm:$0xff]
        %v451 = vld [vmem:[%s258 + $0x5b0] sm:$0xff]
        %v452 = vld [vmem:[%s258 + $0x5b8] sm:$0xff]
        %v453 = vld [vmem:[%s258 + $0x5c0] sm:$0xff]
        %v454 = vld [vmem:[%s258 + $0x5c8] sm:$0xff]
        %v455 = vld [vmem:[%s258 + $0x5d0] sm:$0xff]
        %v456 = vld [vmem:[%s258 + $0x5d8] sm:$0xff]
        %v457 = vld [vmem:[%s258 + $0x5e0] sm:$0xff]
        %v458 = vld [vmem:[%s258 + $0x5e8] sm:$0xff]
        %v459 = vld [vmem:[%s258 + $0x5f0] sm:$0xff]
        %v460 = vld [vmem:[%s258 + $0x5f8] sm:$0xff]
        %v461 = vld [vmem:[%s258 + $0x600] sm:$0xff]
        %v462 = vld [vmem:[%s258 + $0x608] sm:$0xff]
        %v463 = vld [vmem:[%s258 + $0x610] sm:$0xff]
        %v464 = vld [vmem:[%s258 + $0x618] sm:$0xff]
        %v465 = vld [vmem:[%s258 + $0x620] sm:$0xff]
        %v466 = vld [vmem:[%s258 + $0x628] sm:$0xff]
        %v467 = vld [vmem:[%s258 + $0x630] sm:$0xff]
        %v468 = vld [vmem:[%s258 + $0x638] sm:$0xff]
        %v469 = vld [vmem:[%s258 + $0x640] sm:$0xff]
        %v470 = vld [vmem:[%s258 + $0x648] sm:$0xff]
        %v471 = vld [vmem:[%s258 + $0x650] sm:$0xff]
        %v472 = vld [vmem:[%s258 + $0x658] sm:$0xff]
        %v473 = vld [vmem:[%s258 + $0x660] sm:$0xff]
        %v474 = vld [vmem:[%s258 + $0x668] sm:$0xff]
        %v475 = vld [vmem:[%s258 + $0x670] sm:$0xff]
        %v476 = vld [vmem:[%s258 + $0x678] sm:$0xff]
        %v477 = vld [vmem:[%s258 + $0x680] sm:$0xff]
        %v478 = vld [vmem:[%s258 + $0x688] sm:$0xff]
        %v479 = vld [vmem:[%s258 + $0x690] sm:$0xff]
        %v480 = vld [vmem:[%s258 + $0x698] sm:$0xff]
        %v481 = vld [vmem:[%s258 + $0x6a0] sm:$0xff]
        %v482 = vld [vmem:[%s258 + $0x6a8] sm:$0xff]
        %v483 = vld [vmem:[%s258 + $0x6b0] sm:$0xff]
        %v484 = vld [vmem:[%s258 + $0x6b8] sm:$0xff]
        %v485 = vld [vmem:[%s258 + $0x6c0] sm:$0xff]
        %v486 = vld [vmem:[%s258 + $0x6c8] sm:$0xff]
        %v487 = vld [vmem:[%s258 + $0x6d0] sm:$0xff]
        %v488 = vld [vmem:[%s258 + $0x6d8] sm:$0xff]
        %v489 = vld [vmem:[%s258 + $0x6e0] sm:$0xff]
        %v490 = vld [vmem:[%s258 + $0x6e8] sm:$0xff]
        %v491 = vld [vmem:[%s258 + $0x6f0] sm:$0xff]
        %v492 = vld [vmem:[%s258 + $0x6f8] sm:$0xff]
        %v493 = vld [vmem:[%s258 + $0x700] sm:$0xff]
        %v494 = vld [vmem:[%s258 + $0x708] sm:$0xff]
        %v495 = vld [vmem:[%s258 + $0x710] sm:$0xff]
        %v496 = vld [vmem:[%s258 + $0x718] sm:$0xff]
        %v497 = vld [vmem:[%s258 + $0x720] sm:$0xff]
        %v498 = vld [vmem:[%s258 + $0x728] sm:$0xff]
        %v499 = vld [vmem:[%s258 + $0x730] sm:$0xff]
        %v500 = vld [vmem:[%s258 + $0x738] sm:$0xff]
        %v501 = vld [vmem:[%s258 + $0x740] sm:$0xff]
        %v502 = vld [vmem:[%s258 + $0x748] sm:$0xff]
        %v503 = vld [vmem:[%s258 + $0x750] sm:$0xff]
        %v504 = vld [vmem:[%s258 + $0x758] sm:$0xff]
        %v505 = vld [vmem:[%s258 + $0x760] sm:$0xff]
        %v506 = vld [vmem:[%s258 + $0x768] sm:$0xff]
        %v507 = vld [vmem:[%s258 + $0x770] sm:$0xff]
        %v508 = vld [vmem:[%s258 + $0x778] sm:$0xff]
        %v509 = vld [vmem:[%s258 + $0x780] sm:$0xff]
        %v510 = vld [vmem:[%s258 + $0x788] sm:$0xff]
        %v511 = vld [vmem:[%s258 + $0x790] sm:$0xff]
        %v512 = vld [vmem:[%s258 + $0x798] sm:$0xff]
        %v513 = vld [vmem:[%s258 + $0x7a0] sm:$0xff]
        %v514 = vld [vmem:[%s258 + $0x7a8] sm:$0xff]
        %v515 = vld [vmem:[%s258 + $0x7b0] sm:$0xff]
        %v516 = vld [vmem:[%s258 + $0x7b8] sm:$0xff]
        %v517 = vld [vmem:[%s258 + $0x7c0] sm:$0xff]
        %v518 = vld [vmem:[%s258 + $0x7c8] sm:$0xff]
        %v519 = vld [vmem:[%s258 + $0x7d0] sm:$0xff]
        %v520 = vld [vmem:[%s258 + $0x7d8] sm:$0xff]
        %v521 = vld [vmem:[%s258 + $0x7e0] sm:$0xff]
        %v522 = vld [vmem:[%s258 + $0x7e8] sm:$0xff]
        %v523 = vld [vmem:[%s258 + $0x7f0] sm:$0xff]
        %v524 = vld [vmem:[%s258 + $0x7f8] sm:$0xff]
        %v525 = vld [vmem:[%s258 + $0x800] sm:$0xff]
        %v526 = vld [vmem:[%s258 + $0x808] sm:$0xff]
        %v527 = vld [vmem:[%s258 + $0x810] sm:$0xff]
        %v528 = vld [vmem:[%s258 + $0x818] sm:$0xff]
        %v529 = vld [vmem:[%s258 + $0x820] sm:$0xff]
        %v530 = vld [vmem:[%s258 + $0x828] sm:$0xff]
        %v531 = vld [vmem:[%s258 + $0x830] sm:$0xff]
        %v532 = vld [vmem:[%s258 + $0x838] sm:$0xff]
        %v533 = vld [vmem:[%s258 + $0x840] sm:$0xff]
        %v534 = vld [vmem:[%s258 + $0x848] sm:$0xff]
        %v535 = vld [vmem:[%s258 + $0x850] sm:$0xff]
        %v536 = vld [vmem:[%s258 + $0x858] sm:$0xff]
        %v537 = vld [vmem:[%s258 + $0x860] sm:$0xff]
        %v538 = vld [vmem:[%s258 + $0x868] sm:$0xff]
        %v539 = vld [vmem:[%s258 + $0x870] sm:$0xff]
        %v540 = vld [vmem:[%s258 + $0x878] sm:$0xff]
        %v541 = vld [vmem:[%s253] sm:$0xff]
        %543 = vset.pattern.permute.xlu0 0
        %544 = vperm.xlu0 %543, %v269
        %v545 = vpop.permute.xlu0 %544
        %548 = vset.pattern.permute.xlu0 0
        %549 = vperm.xlu0 %548, %v270
        %v550 = vpop.permute.xlu0 %549
        %553 = vset.pattern.permute.xlu0 0
        %554 = vperm.xlu0 %553, %v271
        %v555 = vpop.permute.xlu0 %554
        %558 = vset.pattern.permute.xlu0 0
        %559 = vperm.xlu0 %558, %v272
        %v560 = vpop.permute.xlu0 %559
        %563 = vset.pattern.permute.xlu0 0
        %564 = vperm.xlu0 %563, %v273
        %v565 = vpop.permute.xlu0 %564
        %568 = vset.pattern.permute.xlu0 0
        %569 = vperm.xlu0 %568, %v274
        %v570 = vpop.permute.xlu0 %569
        %573 = vset.pattern.permute.xlu0 0
        %574 = vperm.xlu0 %573, %v275
        %v575 = vpop.permute.xlu0 %574
        %578 = vset.pattern.permute.xlu0 0
        %579 = vperm.xlu0 %578, %v276
        %v580 = vpop.permute.xlu0 %579
        %583 = vset.pattern.permute.xlu0 0
        %584 = vperm.xlu0 %583, %v277
        %v585 = vpop.permute.xlu0 %584
        %588 = vset.pattern.permute.xlu0 0
        %589 = vperm.xlu0 %588, %v278
        %v590 = vpop.permute.xlu0 %589
        %593 = vset.pattern.permute.xlu0 0
        %594 = vperm.xlu0 %593, %v279
        %v595 = vpop.permute.xlu0 %594
        %598 = vset.pattern.permute.xlu0 0
        %599 = vperm.xlu0 %598, %v280
        %v600 = vpop.permute.xlu0 %599
        %603 = vset.pattern.permute.xlu0 0
        %604 = vperm.xlu0 %603, %v281
        %v605 = vpop.permute.xlu0 %604
        %608 = vset.pattern.permute.xlu0 0
        %609 = vperm.xlu0 %608, %v282
        %v610 = vpop.permute.xlu0 %609
        %613 = vset.pattern.permute.xlu0 0
        %614 = vperm.xlu0 %613, %v283
        %v615 = vpop.permute.xlu0 %614
        %618 = vset.pattern.permute.xlu0 0
        %619 = vperm.xlu0 %618, %v284
        %v620 = vpop.permute.xlu0 %619
        %623 = vset.pattern.permute.xlu0 0
        %624 = vperm.xlu0 %623, %v285
        %v625 = vpop.permute.xlu0 %624
        %628 = vset.pattern.permute.xlu0 0
        %629 = vperm.xlu0 %628, %v286
        %v630 = vpop.permute.xlu0 %629
        %633 = vset.pattern.permute.xlu0 0
        %634 = vperm.xlu0 %633, %v287
        %v635 = vpop.permute.xlu0 %634
        %638 = vset.pattern.permute.xlu0 0
        %639 = vperm.xlu0 %638, %v288
        %v640 = vpop.permute.xlu0 %639
        %643 = vset.pattern.permute.xlu0 0
        %644 = vperm.xlu0 %643, %v289
        %v645 = vpop.permute.xlu0 %644
        %648 = vset.pattern.permute.xlu0 0
        %649 = vperm.xlu0 %648, %v290
        %v650 = vpop.permute.xlu0 %649
        %653 = vset.pattern.permute.xlu0 0
        %654 = vperm.xlu0 %653, %v291
        %v655 = vpop.permute.xlu0 %654
        %658 = vset.pattern.permute.xlu0 0
        %659 = vperm.xlu0 %658, %v292
        %v660 = vpop.permute.xlu0 %659
        %vm662 = vcmp.ge.f32.partialorder %v541, %v545
        %vm663 = vcmp.ge.f32.partialorder %v541, %v550
        %vm664 = vcmp.ge.f32.partialorder %v541, %v555
        %vm665 = vcmp.ge.f32.partialorder %v541, %v560
        %vm666 = vcmp.ge.f32.partialorder %v541, %v565
        %vm667 = vcmp.ge.f32.partialorder %v541, %v570
        %vm668 = vcmp.ge.f32.partialorder %v541, %v575
        %vm669 = vcmp.ge.f32.partialorder %v541, %v580
        %vm670 = vcmp.ge.f32.partialorder %v541, %v585
        %vm671 = vcmp.ge.f32.partialorder %v541, %v590
        %vm672 = vcmp.ge.f32.partialorder %v541, %v595
        %vm673 = vcmp.ge.f32.partialorder %v541, %v600
        %vm674 = vcmp.ge.f32.partialorder %v541, %v605
        %vm675 = vcmp.ge.f32.partialorder %v541, %v610
        %vm676 = vcmp.ge.f32.partialorder %v541, %v615
        %vm677 = vcmp.ge.f32.partialorder %v541, %v620
        %vm678 = vcmp.ge.f32.partialorder %v541, %v625
        %vm679 = vcmp.ge.f32.partialorder %v541, %v630
        %vm680 = vcmp.ge.f32.partialorder %v541, %v635
        %vm681 = vcmp.ge.f32.partialorder %v541, %v640
        %vm682 = vcmp.ge.f32.partialorder %v541, %v645
        %vm683 = vcmp.ge.f32.partialorder %v541, %v650
        %vm684 = vcmp.ge.f32.partialorder %v541, %v655
        %vm685 = vcmp.ge.f32.partialorder %v541, %v660
        %687 = vset.pattern.permute.xlu0 0
        %688 = vperm.xlu0 %687, %v293
        %v689 = vpop.permute.xlu0 %688
        %692 = vset.pattern.permute.xlu0 0
        %693 = vperm.xlu0 %692, %v294
        %v694 = vpop.permute.xlu0 %693
        %697 = vset.pattern.permute.xlu0 0
        %698 = vperm.xlu0 %697, %v295
        %v699 = vpop.permute.xlu0 %698
        %702 = vset.pattern.permute.xlu0 0
        %703 = vperm.xlu0 %702, %v296
        %v704 = vpop.permute.xlu0 %703
        %707 = vset.pattern.permute.xlu0 0
        %708 = vperm.xlu0 %707, %v297
        %v709 = vpop.permute.xlu0 %708
        %712 = vset.pattern.permute.xlu0 0
        %713 = vperm.xlu0 %712, %v298
        %v714 = vpop.permute.xlu0 %713
        %717 = vset.pattern.permute.xlu0 0
        %718 = vperm.xlu0 %717, %v299
        %v719 = vpop.permute.xlu0 %718
        %722 = vset.pattern.permute.xlu0 0
        %723 = vperm.xlu0 %722, %v300
        %v724 = vpop.permute.xlu0 %723
        %727 = vset.pattern.permute.xlu0 0
        %728 = vperm.xlu0 %727, %v301
        %v729 = vpop.permute.xlu0 %728
        %732 = vset.pattern.permute.xlu0 0
        %733 = vperm.xlu0 %732, %v302
        %v734 = vpop.permute.xlu0 %733
        %737 = vset.pattern.permute.xlu0 0
        %738 = vperm.xlu0 %737, %v303
        %v739 = vpop.permute.xlu0 %738
        %742 = vset.pattern.permute.xlu0 0
        %743 = vperm.xlu0 %742, %v304
        %v744 = vpop.permute.xlu0 %743
        %747 = vset.pattern.permute.xlu0 0
        %748 = vperm.xlu0 %747, %v305
        %v749 = vpop.permute.xlu0 %748
        %752 = vset.pattern.permute.xlu0 0
        %753 = vperm.xlu0 %752, %v306
        %v754 = vpop.permute.xlu0 %753
        %757 = vset.pattern.permute.xlu0 0
        %758 = vperm.xlu0 %757, %v307
        %v759 = vpop.permute.xlu0 %758
        %762 = vset.pattern.permute.xlu0 0
        %763 = vperm.xlu0 %762, %v308
        %v764 = vpop.permute.xlu0 %763
        %767 = vset.pattern.permute.xlu0 0
        %768 = vperm.xlu0 %767, %v309
        %v769 = vpop.permute.xlu0 %768
        %772 = vset.pattern.permute.xlu0 0
        %773 = vperm.xlu0 %772, %v310
        %v774 = vpop.permute.xlu0 %773
        %777 = vset.pattern.permute.xlu0 0
        %778 = vperm.xlu0 %777, %v311
        %v779 = vpop.permute.xlu0 %778
        %782 = vset.pattern.permute.xlu0 0
        %783 = vperm.xlu0 %782, %v312
        %v784 = vpop.permute.xlu0 %783
        %787 = vset.pattern.permute.xlu0 0
        %788 = vperm.xlu0 %787, %v313
        %v789 = vpop.permute.xlu0 %788
        %792 = vset.pattern.permute.xlu0 0
        %793 = vperm.xlu0 %792, %v314
        %v794 = vpop.permute.xlu0 %793
        %797 = vset.pattern.permute.xlu0 0
        %798 = vperm.xlu0 %797, %v315
        %v799 = vpop.permute.xlu0 %798
        %802 = vset.pattern.permute.xlu0 0
        %803 = vperm.xlu0 %802, %v316
        %v804 = vpop.permute.xlu0 %803
        %vm806 = vcmp.lt.f32.partialorder %v541, %v689
        %vm807 = vcmp.lt.f32.partialorder %v541, %v694
        %vm808 = vcmp.lt.f32.partialorder %v541, %v699
        %vm809 = vcmp.lt.f32.partialorder %v541, %v704
        %vm810 = vcmp.lt.f32.partialorder %v541, %v709
        %vm811 = vcmp.lt.f32.partialorder %v541, %v714
        %vm812 = vcmp.lt.f32.partialorder %v541, %v719
        %vm813 = vcmp.lt.f32.partialorder %v541, %v724
        %vm814 = vcmp.lt.f32.partialorder %v541, %v729
        %vm815 = vcmp.lt.f32.partialorder %v541, %v734
        %vm816 = vcmp.lt.f32.partialorder %v541, %v739
        %vm817 = vcmp.lt.f32.partialorder %v541, %v744
        %vm818 = vcmp.lt.f32.partialorder %v541, %v749
        %vm819 = vcmp.lt.f32.partialorder %v541, %v754
        %vm820 = vcmp.lt.f32.partialorder %v541, %v759
        %vm821 = vcmp.lt.f32.partialorder %v541, %v764
        %vm822 = vcmp.lt.f32.partialorder %v541, %v769
        %vm823 = vcmp.lt.f32.partialorder %v541, %v774
        %vm824 = vcmp.lt.f32.partialorder %v541, %v779
        %vm825 = vcmp.lt.f32.partialorder %v541, %v784
        %vm826 = vcmp.lt.f32.partialorder %v541, %v789
        %vm827 = vcmp.lt.f32.partialorder %v541, %v794
        %vm828 = vcmp.lt.f32.partialorder %v541, %v799
        %vm829 = vcmp.lt.f32.partialorder %v541, %v804
        %vm830 = vmand %vm662, %vm806
        %vm831 = vmand %vm663, %vm807
        %vm832 = vmand %vm664, %vm808
        %vm833 = vmand %vm665, %vm809
        %vm834 = vmand %vm666, %vm810
        %vm835 = vmand %vm667, %vm811
        %vm836 = vmand %vm668, %vm812
        %vm837 = vmand %vm669, %vm813
        %vm838 = vmand %vm670, %vm814
        %vm839 = vmand %vm671, %vm815
        %vm840 = vmand %vm672, %vm816
        %vm841 = vmand %vm673, %vm817
        %vm842 = vmand %vm674, %vm818
        %vm843 = vmand %vm675, %vm819
        %vm844 = vmand %vm676, %vm820
        %vm845 = vmand %vm677, %vm821
        %vm846 = vmand %vm678, %vm822
        %vm847 = vmand %vm679, %vm823
        %vm848 = vmand %vm680, %vm824
        %vm849 = vmand %vm681, %vm825
        %vm850 = vmand %vm682, %vm826
        %vm851 = vmand %vm683, %vm827
        %vm852 = vmand %vm684, %vm828
        %vm853 = vmand %vm685, %vm829
        %v854 = vsel %vm830, 1, 0
        %v855 = vsel %vm831, 1, 0
        %v856 = vsel %vm832, 1, 0
        %v857 = vsel %vm833, 1, 0
        %v858 = vsel %vm834, 1, 0
        %v859 = vsel %vm835, 1, 0
        %v860 = vsel %vm836, 1, 0
        %v861 = vsel %vm837, 1, 0
        %v862 = vsel %vm838, 1, 0
        %v863 = vsel %vm839, 1, 0
        %v864 = vsel %vm840, 1, 0
        %v865 = vsel %vm841, 1, 0
        %v866 = vsel %vm842, 1, 0
        %v867 = vsel %vm843, 1, 0
        %v868 = vsel %vm844, 1, 0
        %v869 = vsel %vm845, 1, 0
        %v870 = vsel %vm846, 1, 0
        %v871 = vsel %vm847, 1, 0
        %v872 = vsel %vm848, 1, 0
        %v873 = vsel %vm849, 1, 0
        %v874 = vsel %vm850, 1, 0
        %v875 = vsel %vm851, 1, 0
        %v876 = vsel %vm852, 1, 0
        %v877 = vsel %vm853, 1, 0
        %v878 = vcvt.s32.f32 %v854
        %v879 = vcvt.s32.f32 %v855
        %v880 = vcvt.s32.f32 %v856
        %v881 = vcvt.s32.f32 %v857
        %v882 = vcvt.s32.f32 %v858
        %v883 = vcvt.s32.f32 %v859
        %v884 = vcvt.s32.f32 %v860
        %v885 = vcvt.s32.f32 %v861
        %v886 = vcvt.s32.f32 %v862
        %v887 = vcvt.s32.f32 %v863
        %v888 = vcvt.s32.f32 %v864
        %v889 = vcvt.s32.f32 %v865
        %v890 = vcvt.s32.f32 %v866
        %v891 = vcvt.s32.f32 %v867
        %v892 = vcvt.s32.f32 %v868
        %v893 = vcvt.s32.f32 %v869
        %v894 = vcvt.s32.f32 %v870
        %v895 = vcvt.s32.f32 %v871
        %v896 = vcvt.s32.f32 %v872
        %v897 = vcvt.s32.f32 %v873
        %v898 = vcvt.s32.f32 %v874
        %v899 = vcvt.s32.f32 %v875
        %v900 = vcvt.s32.f32 %v876
        %v901 = vcvt.s32.f32 %v877
        %v902 = vsub.f32 %v541, %v545
        %v903 = vsub.f32 %v541, %v550
        %v904 = vsub.f32 %v541, %v555
        %v905 = vsub.f32 %v541, %v560
        %v906 = vsub.f32 %v541, %v565
        %v907 = vsub.f32 %v541, %v570
        %v908 = vsub.f32 %v541, %v575
        %v909 = vsub.f32 %v541, %v580
        %v910 = vsub.f32 %v541, %v585
        %v911 = vsub.f32 %v541, %v590
        %v912 = vsub.f32 %v541, %v595
        %v913 = vsub.f32 %v541, %v600
        %v914 = vsub.f32 %v541, %v605
        %v915 = vsub.f32 %v541, %v610
        %v916 = vsub.f32 %v541, %v615
        %v917 = vsub.f32 %v541, %v620
        %v918 = vsub.f32 %v541, %v625
        %v919 = vsub.f32 %v541, %v630
        %v920 = vsub.f32 %v541, %v635
        %v921 = vsub.f32 %v541, %v640
        %v922 = vsub.f32 %v541, %v645
        %v923 = vsub.f32 %v541, %v650
        %v924 = vsub.f32 %v541, %v655
        %v925 = vsub.f32 %v541, %v660
        %927 = vset.pattern.permute.xlu0 0
        %928 = vperm.xlu0 %927, %v341
        %v929 = vpop.permute.xlu0 %928
        %932 = vset.pattern.permute.xlu0 0
        %933 = vperm.xlu0 %932, %v342
        %v934 = vpop.permute.xlu0 %933
        %937 = vset.pattern.permute.xlu0 0
        %938 = vperm.xlu0 %937, %v343
        %v939 = vpop.permute.xlu0 %938
        %942 = vset.pattern.permute.xlu0 0
        %943 = vperm.xlu0 %942, %v344
        %v944 = vpop.permute.xlu0 %943
        %947 = vset.pattern.permute.xlu0 0
        %948 = vperm.xlu0 %947, %v345
        %v949 = vpop.permute.xlu0 %948
        %952 = vset.pattern.permute.xlu0 0
        %953 = vperm.xlu0 %952, %v346
        %v954 = vpop.permute.xlu0 %953
        %957 = vset.pattern.permute.xlu0 0
        %958 = vperm.xlu0 %957, %v347
        %v959 = vpop.permute.xlu0 %958
        %962 = vset.pattern.permute.xlu0 0
        %963 = vperm.xlu0 %962, %v348
        %v964 = vpop.permute.xlu0 %963
        %967 = vset.pattern.permute.xlu0 0
        %968 = vperm.xlu0 %967, %v349
        %v969 = vpop.permute.xlu0 %968
        %972 = vset.pattern.permute.xlu0 0
        %973 = vperm.xlu0 %972, %v350
        %v974 = vpop.permute.xlu0 %973
        %977 = vset.pattern.permute.xlu0 0
        %978 = vperm.xlu0 %977, %v351
        %v979 = vpop.permute.xlu0 %978
        %982 = vset.pattern.permute.xlu0 0
        %983 = vperm.xlu0 %982, %v352
        %v984 = vpop.permute.xlu0 %983
        %987 = vset.pattern.permute.xlu0 0
        %988 = vperm.xlu0 %987, %v353
        %v989 = vpop.permute.xlu0 %988
        %992 = vset.pattern.permute.xlu0 0
        %993 = vperm.xlu0 %992, %v354
        %v994 = vpop.permute.xlu0 %993
        %997 = vset.pattern.permute.xlu0 0
        %998 = vperm.xlu0 %997, %v355
        %v999 = vpop.permute.xlu0 %998
        %1002 = vset.pattern.permute.xlu0 0
        %1003 = vperm.xlu0 %1002, %v356
        %v1004 = vpop.permute.xlu0 %1003
        %1007 = vset.pattern.permute.xlu0 0
        %1008 = vperm.xlu0 %1007, %v357
        %v1009 = vpop.permute.xlu0 %1008
        %1012 = vset.pattern.permute.xlu0 0
        %1013 = vperm.xlu0 %1012, %v358
        %v1014 = vpop.permute.xlu0 %1013
        %1017 = vset.pattern.permute.xlu0 0
        %1018 = vperm.xlu0 %1017, %v359
        %v1019 = vpop.permute.xlu0 %1018
        %1022 = vset.pattern.permute.xlu0 0
        %1023 = vperm.xlu0 %1022, %v360
        %v1024 = vpop.permute.xlu0 %1023
        %1027 = vset.pattern.permute.xlu0 0
        %1028 = vperm.xlu0 %1027, %v361
        %v1029 = vpop.permute.xlu0 %1028
        %1032 = vset.pattern.permute.xlu0 0
        %1033 = vperm.xlu0 %1032, %v362
        %v1034 = vpop.permute.xlu0 %1033
        %1037 = vset.pattern.permute.xlu0 0
        %1038 = vperm.xlu0 %1037, %v363
        %v1039 = vpop.permute.xlu0 %1038
        %1042 = vset.pattern.permute.xlu0 0
        %1043 = vperm.xlu0 %1042, %v364
        %v1044 = vpop.permute.xlu0 %1043
        %v1046 = vmul.f32 %v902, %v929
        %v1047 = vmul.f32 %v903, %v934
        %v1048 = vmul.f32 %v904, %v939
        %v1049 = vmul.f32 %v905, %v944
        %v1050 = vmul.f32 %v906, %v949
        %v1051 = vmul.f32 %v907, %v954
        %v1052 = vmul.f32 %v908, %v959
        %v1053 = vmul.f32 %v909, %v964
        %v1054 = vmul.f32 %v910, %v969
        %v1055 = vmul.f32 %v911, %v974
        %v1056 = vmul.f32 %v912, %v979
        %v1057 = vmul.f32 %v913, %v984
        %v1058 = vmul.f32 %v914, %v989
        %v1059 = vmul.f32 %v915, %v994
        %v1060 = vmul.f32 %v916, %v999
        %v1061 = vmul.f32 %v917, %v1004
        %v1062 = vmul.f32 %v918, %v1009
        %v1063 = vmul.f32 %v919, %v1014
        %v1064 = vmul.f32 %v920, %v1019
        %v1065 = vmul.f32 %v921, %v1024
        %v1066 = vmul.f32 %v922, %v1029
        %v1067 = vmul.f32 %v923, %v1034
        %v1068 = vmul.f32 %v924, %v1039
        %v1069 = vmul.f32 %v925, %v1044
        %v1070 = vmul.f32 %v1046, %v878
        %v1071 = vmul.f32 %v1047, %v879
        %v1072 = vmul.f32 %v1048, %v880
        %v1073 = vmul.f32 %v1049, %v881
        %v1074 = vmul.f32 %v1050, %v882
        %v1075 = vmul.f32 %v1051, %v883
        %v1076 = vmul.f32 %v1052, %v884
        %v1077 = vmul.f32 %v1053, %v885
        %v1078 = vmul.f32 %v1054, %v886
        %v1079 = vmul.f32 %v1055, %v887
        %v1080 = vmul.f32 %v1056, %v888
        %v1081 = vmul.f32 %v1057, %v889
        %v1082 = vmul.f32 %v1058, %v890
        %v1083 = vmul.f32 %v1059, %v891
        %v1084 = vmul.f32 %v1060, %v892
        %v1085 = vmul.f32 %v1061, %v893
        %v1086 = vmul.f32 %v1062, %v894
        %v1087 = vmul.f32 %v1063, %v895
        %v1088 = vmul.f32 %v1064, %v896
        %v1089 = vmul.f32 %v1065, %v897
        %v1090 = vmul.f32 %v1066, %v898
        %v1091 = vmul.f32 %v1067, %v899
        %v1092 = vmul.f32 %v1068, %v900
        %v1093 = vmul.f32 %v1069, %v901
        %1095 = vset.pattern.permute.xlu0 0
        %1096 = vperm.xlu0 %1095, %v317
        %v1097 = vpop.permute.xlu0 %1096
        %1100 = vset.pattern.permute.xlu0 0
        %1101 = vperm.xlu0 %1100, %v318
        %v1102 = vpop.permute.xlu0 %1101
        %1105 = vset.pattern.permute.xlu0 0
        %1106 = vperm.xlu0 %1105, %v319
        %v1107 = vpop.permute.xlu0 %1106
        %1110 = vset.pattern.permute.xlu0 0
        %1111 = vperm.xlu0 %1110, %v320
        %v1112 = vpop.permute.xlu0 %1111
        %1115 = vset.pattern.permute.xlu0 0
        %1116 = vperm.xlu0 %1115, %v321
        %v1117 = vpop.permute.xlu0 %1116
        %1120 = vset.pattern.permute.xlu0 0
        %1121 = vperm.xlu0 %1120, %v322
        %v1122 = vpop.permute.xlu0 %1121
        %1125 = vset.pattern.permute.xlu0 0
        %1126 = vperm.xlu0 %1125, %v323
        %v1127 = vpop.permute.xlu0 %1126
        %1130 = vset.pattern.permute.xlu0 0
        %1131 = vperm.xlu0 %1130, %v324
        %v1132 = vpop.permute.xlu0 %1131
        %1135 = vset.pattern.permute.xlu0 0
        %1136 = vperm.xlu0 %1135, %v325
        %v1137 = vpop.permute.xlu0 %1136
        %1140 = vset.pattern.permute.xlu0 0
        %1141 = vperm.xlu0 %1140, %v326
        %v1142 = vpop.permute.xlu0 %1141
        %1145 = vset.pattern.permute.xlu0 0
        %1146 = vperm.xlu0 %1145, %v327
        %v1147 = vpop.permute.xlu0 %1146
        %1150 = vset.pattern.permute.xlu0 0
        %1151 = vperm.xlu0 %1150, %v328
        %v1152 = vpop.permute.xlu0 %1151
        %1155 = vset.pattern.permute.xlu0 0
        %1156 = vperm.xlu0 %1155, %v329
        %v1157 = vpop.permute.xlu0 %1156
        %1160 = vset.pattern.permute.xlu0 0
        %1161 = vperm.xlu0 %1160, %v330
        %v1162 = vpop.permute.xlu0 %1161
        %1165 = vset.pattern.permute.xlu0 0
        %1166 = vperm.xlu0 %1165, %v331
        %v1167 = vpop.permute.xlu0 %1166
        %1170 = vset.pattern.permute.xlu0 0
        %1171 = vperm.xlu0 %1170, %v332
        %v1172 = vpop.permute.xlu0 %1171
        %1175 = vset.pattern.permute.xlu0 0
        %1176 = vperm.xlu0 %1175, %v333
        %v1177 = vpop.permute.xlu0 %1176
        %1180 = vset.pattern.permute.xlu0 0
        %1181 = vperm.xlu0 %1180, %v334
        %v1182 = vpop.permute.xlu0 %1181
        %1185 = vset.pattern.permute.xlu0 0
        %1186 = vperm.xlu0 %1185, %v335
        %v1187 = vpop.permute.xlu0 %1186
        %1190 = vset.pattern.permute.xlu0 0
        %1191 = vperm.xlu0 %1190, %v336
        %v1192 = vpop.permute.xlu0 %1191
        %1195 = vset.pattern.permute.xlu0 0
        %1196 = vperm.xlu0 %1195, %v337
        %v1197 = vpop.permute.xlu0 %1196
        %1200 = vset.pattern.permute.xlu0 0
        %1201 = vperm.xlu0 %1200, %v338
        %v1202 = vpop.permute.xlu0 %1201
        %1205 = vset.pattern.permute.xlu0 0
        %1206 = vperm.xlu0 %1205, %v339
        %v1207 = vpop.permute.xlu0 %1206
        %1210 = vset.pattern.permute.xlu0 0
        %1211 = vperm.xlu0 %1210, %v340
        %v1212 = vpop.permute.xlu0 %1211
        %v1214 = vsub.f32 %v1097, %v541
        %v1215 = vsub.f32 %v1102, %v541
        %v1216 = vsub.f32 %v1107, %v541
        %v1217 = vsub.f32 %v1112, %v541
        %v1218 = vsub.f32 %v1117, %v541
        %v1219 = vsub.f32 %v1122, %v541
        %v1220 = vsub.f32 %v1127, %v541
        %v1221 = vsub.f32 %v1132, %v541
        %v1222 = vsub.f32 %v1137, %v541
        %v1223 = vsub.f32 %v1142, %v541
        %v1224 = vsub.f32 %v1147, %v541
        %v1225 = vsub.f32 %v1152, %v541
        %v1226 = vsub.f32 %v1157, %v541
        %v1227 = vsub.f32 %v1162, %v541
        %v1228 = vsub.f32 %v1167, %v541
        %v1229 = vsub.f32 %v1172, %v541
        %v1230 = vsub.f32 %v1177, %v541
        %v1231 = vsub.f32 %v1182, %v541
        %v1232 = vsub.f32 %v1187, %v541
        %v1233 = vsub.f32 %v1192, %v541
        %v1234 = vsub.f32 %v1197, %v541
        %v1235 = vsub.f32 %v1202, %v541
        %v1236 = vsub.f32 %v1207, %v541
        %v1237 = vsub.f32 %v1212, %v541
        %1239 = vset.pattern.permute.xlu0 0
        %1240 = vperm.xlu0 %1239, %v365
        %v1241 = vpop.permute.xlu0 %1240
        %1244 = vset.pattern.permute.xlu0 0
        %1245 = vperm.xlu0 %1244, %v366
        %v1246 = vpop.permute.xlu0 %1245
        %1249 = vset.pattern.permute.xlu0 0
        %1250 = vperm.xlu0 %1249, %v367
        %v1251 = vpop.permute.xlu0 %1250
        %1254 = vset.pattern.permute.xlu0 0
        %1255 = vperm.xlu0 %1254, %v368
        %v1256 = vpop.permute.xlu0 %1255
        %1259 = vset.pattern.permute.xlu0 0
        %1260 = vperm.xlu0 %1259, %v369
        %v1261 = vpop.permute.xlu0 %1260
        %1264 = vset.pattern.permute.xlu0 0
        %1265 = vperm.xlu0 %1264, %v370
        %v1266 = vpop.permute.xlu0 %1265
        %1269 = vset.pattern.permute.xlu0 0
        %1270 = vperm.xlu0 %1269, %v371
        %v1271 = vpop.permute.xlu0 %1270
        %1274 = vset.pattern.permute.xlu0 0
        %1275 = vperm.xlu0 %1274, %v372
        %v1276 = vpop.permute.xlu0 %1275
        %1279 = vset.pattern.permute.xlu0 0
        %1280 = vperm.xlu0 %1279, %v373
        %v1281 = vpop.permute.xlu0 %1280
        %1284 = vset.pattern.permute.xlu0 0
        %1285 = vperm.xlu0 %1284, %v374
        %v1286 = vpop.permute.xlu0 %1285
        %1289 = vset.pattern.permute.xlu0 0
        %1290 = vperm.xlu0 %1289, %v375
        %v1291 = vpop.permute.xlu0 %1290
        %1294 = vset.pattern.permute.xlu0 0
        %1295 = vperm.xlu0 %1294, %v376
        %v1296 = vpop.permute.xlu0 %1295
        %1299 = vset.pattern.permute.xlu0 0
        %1300 = vperm.xlu0 %1299, %v377
        %v1301 = vpop.permute.xlu0 %1300
        %1304 = vset.pattern.permute.xlu0 0
        %1305 = vperm.xlu0 %1304, %v378
        %v1306 = vpop.permute.xlu0 %1305
        %1309 = vset.pattern.permute.xlu0 0
        %1310 = vperm.xlu0 %1309, %v379
        %v1311 = vpop.permute.xlu0 %1310
        %1314 = vset.pattern.permute.xlu0 0
        %1315 = vperm.xlu0 %1314, %v380
        %v1316 = vpop.permute.xlu0 %1315
        %1319 = vset.pattern.permute.xlu0 0
        %1320 = vperm.xlu0 %1319, %v381
        %v1321 = vpop.permute.xlu0 %1320
        %1324 = vset.pattern.permute.xlu0 0
        %1325 = vperm.xlu0 %1324, %v382
        %v1326 = vpop.permute.xlu0 %1325
        %1329 = vset.pattern.permute.xlu0 0
        %1330 = vperm.xlu0 %1329, %v383
        %v1331 = vpop.permute.xlu0 %1330
        %1334 = vset.pattern.permute.xlu0 0
        %1335 = vperm.xlu0 %1334, %v384
        %v1336 = vpop.permute.xlu0 %1335
        %1339 = vset.pattern.permute.xlu0 0
        %1340 = vperm.xlu0 %1339, %v385
        %v1341 = vpop.permute.xlu0 %1340
        %1344 = vset.pattern.permute.xlu0 0
        %1345 = vperm.xlu0 %1344, %v386
        %v1346 = vpop.permute.xlu0 %1345
        %1349 = vset.pattern.permute.xlu0 0
        %1350 = vperm.xlu0 %1349, %v387
        %v1351 = vpop.permute.xlu0 %1350
        %1354 = vset.pattern.permute.xlu0 0
        %1355 = vperm.xlu0 %1354, %v388
        %v1356 = vpop.permute.xlu0 %1355
        %v1358 = vmul.f32 %v1214, %v1241
        %v1359 = vmul.f32 %v1215, %v1246
        %v1360 = vmul.f32 %v1216, %v1251
        %v1361 = vmul.f32 %v1217, %v1256
        %v1362 = vmul.f32 %v1218, %v1261
        %v1363 = vmul.f32 %v1219, %v1266
        %v1364 = vmul.f32 %v1220, %v1271
        %v1365 = vmul.f32 %v1221, %v1276
        %v1366 = vmul.f32 %v1222, %v1281
        %v1367 = vmul.f32 %v1223, %v1286
        %v1368 = vmul.f32 %v1224, %v1291
        %v1369 = vmul.f32 %v1225, %v1296
        %v1370 = vmul.f32 %v1226, %v1301
        %v1371 = vmul.f32 %v1227, %v1306
        %v1372 = vmul.f32 %v1228, %v1311
        %v1373 = vmul.f32 %v1229, %v1316
        %v1374 = vmul.f32 %v1230, %v1321
        %v1375 = vmul.f32 %v1231, %v1326
        %v1376 = vmul.f32 %v1232, %v1331
        %v1377 = vmul.f32 %v1233, %v1336
        %v1378 = vmul.f32 %v1234, %v1341
        %v1379 = vmul.f32 %v1235, %v1346
        %v1380 = vmul.f32 %v1236, %v1351
        %v1381 = vmul.f32 %v1237, %v1356
        %v1382 = vmul.f32 %v1358, %v879
        %v1383 = vmul.f32 %v1359, %v880
        %v1384 = vmul.f32 %v1360, %v881
        %v1385 = vmul.f32 %v1361, %v882
        %v1386 = vmul.f32 %v1362, %v883
        %v1387 = vmul.f32 %v1363, %v884
        %v1388 = vmul.f32 %v1364, %v885
        %v1389 = vmul.f32 %v1365, %v886
        %v1390 = vmul.f32 %v1366, %v887
        %v1391 = vmul.f32 %v1367, %v888
        %v1392 = vmul.f32 %v1368, %v889
        %v1393 = vmul.f32 %v1369, %v890
        %v1394 = vmul.f32 %v1370, %v891
        %v1395 = vmul.f32 %v1371, %v892
        %v1396 = vmul.f32 %v1372, %v893
        %v1397 = vmul.f32 %v1373, %v894
        %v1398 = vmul.f32 %v1374, %v895
        %v1399 = vmul.f32 %v1375, %v896
        %v1400 = vmul.f32 %v1376, %v897
        %v1401 = vmul.f32 %v1377, %v898
        %v1402 = vmul.f32 %v1378, %v899
        %v1403 = vmul.f32 %v1379, %v900
        %v1404 = vmul.f32 %v1380, %v901
        %v1405 = vmul.f32 %v1381, 0.0
        %v1406 = vadd.f32 %v1070, %v1382
        %v1407 = vadd.f32 %v1071, %v1383
        %v1408 = vadd.f32 %v1072, %v1384
        %v1409 = vadd.f32 %v1073, %v1385
        %v1410 = vadd.f32 %v1074, %v1386
        %v1411 = vadd.f32 %v1075, %v1387
        %v1412 = vadd.f32 %v1076, %v1388
        %v1413 = vadd.f32 %v1077, %v1389
        %v1414 = vadd.f32 %v1078, %v1390
        %v1415 = vadd.f32 %v1079, %v1391
        %v1416 = vadd.f32 %v1080, %v1392
        %v1417 = vadd.f32 %v1081, %v1393
        %v1418 = vadd.f32 %v1082, %v1394
        %v1419 = vadd.f32 %v1083, %v1395
        %v1420 = vadd.f32 %v1084, %v1396
        %v1421 = vadd.f32 %v1085, %v1397
        %v1422 = vadd.f32 %v1086, %v1398
        %v1423 = vadd.f32 %v1087, %v1399
        %v1424 = vadd.f32 %v1088, %v1400
        %v1425 = vadd.f32 %v1089, %v1401
        %v1426 = vadd.f32 %v1090, %v1402
        %v1427 = vadd.f32 %v1091, %v1403
        %v1428 = vadd.f32 %v1092, %v1404
        %v1429 = vadd.f32 %v1093, %v1405
        %1431 = vset.pattern.permute.xlu0 0
        %1432 = vperm.xlu0 %1431, %v413
        %v1433 = vpop.permute.xlu0 %1432
        %1436 = vset.pattern.permute.xlu0 0
        %1437 = vperm.xlu0 %1436, %v414
        %v1438 = vpop.permute.xlu0 %1437
        %1441 = vset.pattern.permute.xlu0 0
        %1442 = vperm.xlu0 %1441, %v415
        %v1443 = vpop.permute.xlu0 %1442
        %1446 = vset.pattern.permute.xlu0 0
        %1447 = vperm.xlu0 %1446, %v416
        %v1448 = vpop.permute.xlu0 %1447
        %1451 = vset.pattern.permute.xlu0 0
        %1452 = vperm.xlu0 %1451, %v417
        %v1453 = vpop.permute.xlu0 %1452
        %1456 = vset.pattern.permute.xlu0 0
        %1457 = vperm.xlu0 %1456, %v418
        %v1458 = vpop.permute.xlu0 %1457
        %1461 = vset.pattern.permute.xlu0 0
        %1462 = vperm.xlu0 %1461, %v419
        %v1463 = vpop.permute.xlu0 %1462
        %1466 = vset.pattern.permute.xlu0 0
        %1467 = vperm.xlu0 %1466, %v420
        %v1468 = vpop.permute.xlu0 %1467
        %1471 = vset.pattern.permute.xlu0 0
        %1472 = vperm.xlu0 %1471, %v421
        %v1473 = vpop.permute.xlu0 %1472
        %1476 = vset.pattern.permute.xlu0 0
        %1477 = vperm.xlu0 %1476, %v422
        %v1478 = vpop.permute.xlu0 %1477
        %1481 = vset.pattern.permute.xlu0 0
        %1482 = vperm.xlu0 %1481, %v423
        %v1483 = vpop.permute.xlu0 %1482
        %1486 = vset.pattern.permute.xlu0 0
        %1487 = vperm.xlu0 %1486, %v424
        %v1488 = vpop.permute.xlu0 %1487
        %1491 = vset.pattern.permute.xlu0 0
        %1492 = vperm.xlu0 %1491, %v425
        %v1493 = vpop.permute.xlu0 %1492
        %1496 = vset.pattern.permute.xlu0 0
        %1497 = vperm.xlu0 %1496, %v426
        %v1498 = vpop.permute.xlu0 %1497
        %1501 = vset.pattern.permute.xlu0 0
        %1502 = vperm.xlu0 %1501, %v427
        %v1503 = vpop.permute.xlu0 %1502
        %1506 = vset.pattern.permute.xlu0 0
        %1507 = vperm.xlu0 %1506, %v428
        %v1508 = vpop.permute.xlu0 %1507
        %1511 = vset.pattern.permute.xlu0 0
        %1512 = vperm.xlu0 %1511, %v429
        %v1513 = vpop.permute.xlu0 %1512
        %1516 = vset.pattern.permute.xlu0 0
        %1517 = vperm.xlu0 %1516, %v430
        %v1518 = vpop.permute.xlu0 %1517
        %1521 = vset.pattern.permute.xlu0 0
        %1522 = vperm.xlu0 %1521, %v431
        %v1523 = vpop.permute.xlu0 %1522
        %1526 = vset.pattern.permute.xlu0 0
        %1527 = vperm.xlu0 %1526, %v432
        %v1528 = vpop.permute.xlu0 %1527
        %1531 = vset.pattern.permute.xlu0 0
        %1532 = vperm.xlu0 %1531, %v433
        %v1533 = vpop.permute.xlu0 %1532
        %1536 = vset.pattern.permute.xlu0 0
        %1537 = vperm.xlu0 %1536, %v434
        %v1538 = vpop.permute.xlu0 %1537
        %1541 = vset.pattern.permute.xlu0 0
        %1542 = vperm.xlu0 %1541, %v435
        %v1543 = vpop.permute.xlu0 %1542
        %1546 = vset.pattern.permute.xlu0 0
        %1547 = vperm.xlu0 %1546, %v436
        %v1548 = vpop.permute.xlu0 %1547
        %v1550 = vmul.f32 %v902, %v1433
        %v1551 = vmul.f32 %v903, %v1438
        %v1552 = vmul.f32 %v904, %v1443
        %v1553 = vmul.f32 %v905, %v1448
        %v1554 = vmul.f32 %v906, %v1453
        %v1555 = vmul.f32 %v907, %v1458
        %v1556 = vmul.f32 %v908, %v1463
        %v1557 = vmul.f32 %v909, %v1468
        %v1558 = vmul.f32 %v910, %v1473
        %v1559 = vmul.f32 %v911, %v1478
        %v1560 = vmul.f32 %v912, %v1483
        %v1561 = vmul.f32 %v913, %v1488
        %v1562 = vmul.f32 %v914, %v1493
        %v1563 = vmul.f32 %v915, %v1498
        %v1564 = vmul.f32 %v916, %v1503
        %v1565 = vmul.f32 %v917, %v1508
        %v1566 = vmul.f32 %v918, %v1513
        %v1567 = vmul.f32 %v919, %v1518
        %v1568 = vmul.f32 %v920, %v1523
        %v1569 = vmul.f32 %v921, %v1528
        %v1570 = vmul.f32 %v922, %v1533
        %v1571 = vmul.f32 %v923, %v1538
        %v1572 = vmul.f32 %v924, %v1543
        %v1573 = vmul.f32 %v925, %v1548
        %v1574 = vmul.f32 %v1550, %v1406
        %v1575 = vmul.f32 %v1551, %v1407
        %v1576 = vmul.f32 %v1552, %v1408
        %v1577 = vmul.f32 %v1553, %v1409
        %v1578 = vmul.f32 %v1554, %v1410
        %v1579 = vmul.f32 %v1555, %v1411
        %v1580 = vmul.f32 %v1556, %v1412
        %v1581 = vmul.f32 %v1557, %v1413
        %v1582 = vmul.f32 %v1558, %v1414
        %v1583 = vmul.f32 %v1559, %v1415
        %v1584 = vmul.f32 %v1560, %v1416
        %v1585 = vmul.f32 %v1561, %v1417
        %v1586 = vmul.f32 %v1562, %v1418
        %v1587 = vmul.f32 %v1563, %v1419
        %v1588 = vmul.f32 %v1564, %v1420
        %v1589 = vmul.f32 %v1565, %v1421
        %v1590 = vmul.f32 %v1566, %v1422
        %v1591 = vmul.f32 %v1567, %v1423
        %v1592 = vmul.f32 %v1568, %v1424
        %v1593 = vmul.f32 %v1569, %v1425
        %v1594 = vmul.f32 %v1570, %v1426
        %v1595 = vmul.f32 %v1571, %v1427
        %v1596 = vmul.f32 %v1572, %v1428
        %v1597 = vmul.f32 %v1573, %v1429
        %1599 = vset.pattern.permute.xlu0 0
        %1600 = vperm.xlu0 %1599, %v389
        %v1601 = vpop.permute.xlu0 %1600
        %1604 = vset.pattern.permute.xlu0 0
        %1605 = vperm.xlu0 %1604, %v390
        %v1606 = vpop.permute.xlu0 %1605
        %1609 = vset.pattern.permute.xlu0 0
        %1610 = vperm.xlu0 %1609, %v391
        %v1611 = vpop.permute.xlu0 %1610
        %1614 = vset.pattern.permute.xlu0 0
        %1615 = vperm.xlu0 %1614, %v392
        %v1616 = vpop.permute.xlu0 %1615
        %1619 = vset.pattern.permute.xlu0 0
        %1620 = vperm.xlu0 %1619, %v393
        %v1621 = vpop.permute.xlu0 %1620
        %1624 = vset.pattern.permute.xlu0 0
        %1625 = vperm.xlu0 %1624, %v394
        %v1626 = vpop.permute.xlu0 %1625
        %1629 = vset.pattern.permute.xlu0 0
        %1630 = vperm.xlu0 %1629, %v395
        %v1631 = vpop.permute.xlu0 %1630
        %1634 = vset.pattern.permute.xlu0 0
        %1635 = vperm.xlu0 %1634, %v396
        %v1636 = vpop.permute.xlu0 %1635
        %1639 = vset.pattern.permute.xlu0 0
        %1640 = vperm.xlu0 %1639, %v397
        %v1641 = vpop.permute.xlu0 %1640
        %1644 = vset.pattern.permute.xlu0 0
        %1645 = vperm.xlu0 %1644, %v398
        %v1646 = vpop.permute.xlu0 %1645
        %1649 = vset.pattern.permute.xlu0 0
        %1650 = vperm.xlu0 %1649, %v399
        %v1651 = vpop.permute.xlu0 %1650
        %1654 = vset.pattern.permute.xlu0 0
        %1655 = vperm.xlu0 %1654, %v400
        %v1656 = vpop.permute.xlu0 %1655
        %1659 = vset.pattern.permute.xlu0 0
        %1660 = vperm.xlu0 %1659, %v401
        %v1661 = vpop.permute.xlu0 %1660
        %1664 = vset.pattern.permute.xlu0 0
        %1665 = vperm.xlu0 %1664, %v402
        %v1666 = vpop.permute.xlu0 %1665
        %1669 = vset.pattern.permute.xlu0 0
        %1670 = vperm.xlu0 %1669, %v403
        %v1671 = vpop.permute.xlu0 %1670
        %1674 = vset.pattern.permute.xlu0 0
        %1675 = vperm.xlu0 %1674, %v404
        %v1676 = vpop.permute.xlu0 %1675
        %1679 = vset.pattern.permute.xlu0 0
        %1680 = vperm.xlu0 %1679, %v405
        %v1681 = vpop.permute.xlu0 %1680
        %1684 = vset.pattern.permute.xlu0 0
        %1685 = vperm.xlu0 %1684, %v406
        %v1686 = vpop.permute.xlu0 %1685
        %1689 = vset.pattern.permute.xlu0 0
        %1690 = vperm.xlu0 %1689, %v407
        %v1691 = vpop.permute.xlu0 %1690
        %1694 = vset.pattern.permute.xlu0 0
        %1695 = vperm.xlu0 %1694, %v408
        %v1696 = vpop.permute.xlu0 %1695
        %1699 = vset.pattern.permute.xlu0 0
        %1700 = vperm.xlu0 %1699, %v409
        %v1701 = vpop.permute.xlu0 %1700
        %1704 = vset.pattern.permute.xlu0 0
        %1705 = vperm.xlu0 %1704, %v410
        %v1706 = vpop.permute.xlu0 %1705
        %1709 = vset.pattern.permute.xlu0 0
        %1710 = vperm.xlu0 %1709, %v411
        %v1711 = vpop.permute.xlu0 %1710
        %1714 = vset.pattern.permute.xlu0 0
        %1715 = vperm.xlu0 %1714, %v412
        %v1716 = vpop.permute.xlu0 %1715
        %v1718 = vsub.f32 %v1601, %v541
        %v1719 = vsub.f32 %v1606, %v541
        %v1720 = vsub.f32 %v1611, %v541
        %v1721 = vsub.f32 %v1616, %v541
        %v1722 = vsub.f32 %v1621, %v541
        %v1723 = vsub.f32 %v1626, %v541
        %v1724 = vsub.f32 %v1631, %v541
        %v1725 = vsub.f32 %v1636, %v541
        %v1726 = vsub.f32 %v1641, %v541
        %v1727 = vsub.f32 %v1646, %v541
        %v1728 = vsub.f32 %v1651, %v541
        %v1729 = vsub.f32 %v1656, %v541
        %v1730 = vsub.f32 %v1661, %v541
        %v1731 = vsub.f32 %v1666, %v541
        %v1732 = vsub.f32 %v1671, %v541
        %v1733 = vsub.f32 %v1676, %v541
        %v1734 = vsub.f32 %v1681, %v541
        %v1735 = vsub.f32 %v1686, %v541
        %v1736 = vsub.f32 %v1691, %v541
        %v1737 = vsub.f32 %v1696, %v541
        %v1738 = vsub.f32 %v1701, %v541
        %v1739 = vsub.f32 %v1706, %v541
        %v1740 = vsub.f32 %v1711, %v541
        %v1741 = vsub.f32 %v1716, %v541
        %1743 = vset.pattern.permute.xlu0 0
        %1744 = vperm.xlu0 %1743, %v437
        %v1745 = vpop.permute.xlu0 %1744
        %1748 = vset.pattern.permute.xlu0 0
        %1749 = vperm.xlu0 %1748, %v438
        %v1750 = vpop.permute.xlu0 %1749
        %1753 = vset.pattern.permute.xlu0 0
        %1754 = vperm.xlu0 %1753, %v439
        %v1755 = vpop.permute.xlu0 %1754
        %1758 = vset.pattern.permute.xlu0 0
        %1759 = vperm.xlu0 %1758, %v440
        %v1760 = vpop.permute.xlu0 %1759
        %1763 = vset.pattern.permute.xlu0 0
        %1764 = vperm.xlu0 %1763, %v441
        %v1765 = vpop.permute.xlu0 %1764
        %1768 = vset.pattern.permute.xlu0 0
        %1769 = vperm.xlu0 %1768, %v442
        %v1770 = vpop.permute.xlu0 %1769
        %1773 = vset.pattern.permute.xlu0 0
        %1774 = vperm.xlu0 %1773, %v443
        %v1775 = vpop.permute.xlu0 %1774
        %1778 = vset.pattern.permute.xlu0 0
        %1779 = vperm.xlu0 %1778, %v444
        %v1780 = vpop.permute.xlu0 %1779
        %1783 = vset.pattern.permute.xlu0 0
        %1784 = vperm.xlu0 %1783, %v445
        %v1785 = vpop.permute.xlu0 %1784
        %1788 = vset.pattern.permute.xlu0 0
        %1789 = vperm.xlu0 %1788, %v446
        %v1790 = vpop.permute.xlu0 %1789
        %1793 = vset.pattern.permute.xlu0 0
        %1794 = vperm.xlu0 %1793, %v447
        %v1795 = vpop.permute.xlu0 %1794
        %1798 = vset.pattern.permute.xlu0 0
        %1799 = vperm.xlu0 %1798, %v448
        %v1800 = vpop.permute.xlu0 %1799
        %1803 = vset.pattern.permute.xlu0 0
        %1804 = vperm.xlu0 %1803, %v449
        %v1805 = vpop.permute.xlu0 %1804
        %1808 = vset.pattern.permute.xlu0 0
        %1809 = vperm.xlu0 %1808, %v450
        %v1810 = vpop.permute.xlu0 %1809
        %1813 = vset.pattern.permute.xlu0 0
        %1814 = vperm.xlu0 %1813, %v451
        %v1815 = vpop.permute.xlu0 %1814
        %1818 = vset.pattern.permute.xlu0 0
        %1819 = vperm.xlu0 %1818, %v452
        %v1820 = vpop.permute.xlu0 %1819
        %1823 = vset.pattern.permute.xlu0 0
        %1824 = vperm.xlu0 %1823, %v453
        %v1825 = vpop.permute.xlu0 %1824
        %1828 = vset.pattern.permute.xlu0 0
        %1829 = vperm.xlu0 %1828, %v454
        %v1830 = vpop.permute.xlu0 %1829
        %1833 = vset.pattern.permute.xlu0 0
        %1834 = vperm.xlu0 %1833, %v455
        %v1835 = vpop.permute.xlu0 %1834
        %1838 = vset.pattern.permute.xlu0 0
        %1839 = vperm.xlu0 %1838, %v456
        %v1840 = vpop.permute.xlu0 %1839
        %1843 = vset.pattern.permute.xlu0 0
        %1844 = vperm.xlu0 %1843, %v457
        %v1845 = vpop.permute.xlu0 %1844
        %1848 = vset.pattern.permute.xlu0 0
        %1849 = vperm.xlu0 %1848, %v458
        %v1850 = vpop.permute.xlu0 %1849
        %1853 = vset.pattern.permute.xlu0 0
        %1854 = vperm.xlu0 %1853, %v459
        %v1855 = vpop.permute.xlu0 %1854
        %1858 = vset.pattern.permute.xlu0 0
        %1859 = vperm.xlu0 %1858, %v460
        %v1860 = vpop.permute.xlu0 %1859
        %v1862 = vmul.f32 %v1718, %v1745
        %v1863 = vmul.f32 %v1719, %v1750
        %v1864 = vmul.f32 %v1720, %v1755
        %v1865 = vmul.f32 %v1721, %v1760
        %v1866 = vmul.f32 %v1722, %v1765
        %v1867 = vmul.f32 %v1723, %v1770
        %v1868 = vmul.f32 %v1724, %v1775
        %v1869 = vmul.f32 %v1725, %v1780
        %v1870 = vmul.f32 %v1726, %v1785
        %v1871 = vmul.f32 %v1727, %v1790
        %v1872 = vmul.f32 %v1728, %v1795
        %v1873 = vmul.f32 %v1729, %v1800
        %v1874 = vmul.f32 %v1730, %v1805
        %v1875 = vmul.f32 %v1731, %v1810
        %v1876 = vmul.f32 %v1732, %v1815
        %v1877 = vmul.f32 %v1733, %v1820
        %v1878 = vmul.f32 %v1734, %v1825
        %v1879 = vmul.f32 %v1735, %v1830
        %v1880 = vmul.f32 %v1736, %v1835
        %v1881 = vmul.f32 %v1737, %v1840
        %v1882 = vmul.f32 %v1738, %v1845
        %v1883 = vmul.f32 %v1739, %v1850
        %v1884 = vmul.f32 %v1740, %v1855
        %v1885 = vmul.f32 %v1741, %v1860
        %v1886 = vmul.f32 %v1862, %v1407
        %v1887 = vmul.f32 %v1863, %v1408
        %v1888 = vmul.f32 %v1864, %v1409
        %v1889 = vmul.f32 %v1865, %v1410
        %v1890 = vmul.f32 %v1866, %v1411
        %v1891 = vmul.f32 %v1867, %v1412
        %v1892 = vmul.f32 %v1868, %v1413
        %v1893 = vmul.f32 %v1869, %v1414
        %v1894 = vmul.f32 %v1870, %v1415
        %v1895 = vmul.f32 %v1871, %v1416
        %v1896 = vmul.f32 %v1872, %v1417
        %v1897 = vmul.f32 %v1873, %v1418
        %v1898 = vmul.f32 %v1874, %v1419
        %v1899 = vmul.f32 %v1875, %v1420
        %v1900 = vmul.f32 %v1876, %v1421
        %v1901 = vmul.f32 %v1877, %v1422
        %v1902 = vmul.f32 %v1878, %v1423
        %v1903 = vmul.f32 %v1879, %v1424
        %v1904 = vmul.f32 %v1880, %v1425
        %v1905 = vmul.f32 %v1881, %v1426
        %v1906 = vmul.f32 %v1882, %v1427
        %v1907 = vmul.f32 %v1883, %v1428
        %v1908 = vmul.f32 %v1884, %v1429
        %v1909 = vmul.f32 %v1885, 0.0
        %v1910 = vadd.f32 %v1574, %v1886
        %v1911 = vadd.f32 %v1575, %v1887
        %v1912 = vadd.f32 %v1576, %v1888
        %v1913 = vadd.f32 %v1577, %v1889
        %v1914 = vadd.f32 %v1578, %v1890
        %v1915 = vadd.f32 %v1579, %v1891
        %v1916 = vadd.f32 %v1580, %v1892
        %v1917 = vadd.f32 %v1581, %v1893
        %v1918 = vadd.f32 %v1582, %v1894
        %v1919 = vadd.f32 %v1583, %v1895
        %v1920 = vadd.f32 %v1584, %v1896
        %v1921 = vadd.f32 %v1585, %v1897
        %v1922 = vadd.f32 %v1586, %v1898
        %v1923 = vadd.f32 %v1587, %v1899
        %v1924 = vadd.f32 %v1588, %v1900
        %v1925 = vadd.f32 %v1589, %v1901
        %v1926 = vadd.f32 %v1590, %v1902
        %v1927 = vadd.f32 %v1591, %v1903
        %v1928 = vadd.f32 %v1592, %v1904
        %v1929 = vadd.f32 %v1593, %v1905
        %v1930 = vadd.f32 %v1594, %v1906
        %v1931 = vadd.f32 %v1595, %v1907
        %v1932 = vadd.f32 %v1596, %v1908
        %v1933 = vadd.f32 %v1597, %v1909
        %1935 = vset.pattern.permute.xlu0 0
        %1936 = vperm.xlu0 %1935, %v485
        %v1937 = vpop.permute.xlu0 %1936
        %1940 = vset.pattern.permute.xlu0 0
        %1941 = vperm.xlu0 %1940, %v486
        %v1942 = vpop.permute.xlu0 %1941
        %1945 = vset.pattern.permute.xlu0 0
        %1946 = vperm.xlu0 %1945, %v487
        %v1947 = vpop.permute.xlu0 %1946
        %1950 = vset.pattern.permute.xlu0 0
        %1951 = vperm.xlu0 %1950, %v488
        %v1952 = vpop.permute.xlu0 %1951
        %1955 = vset.pattern.permute.xlu0 0
        %1956 = vperm.xlu0 %1955, %v489
        %v1957 = vpop.permute.xlu0 %1956
        %1960 = vset.pattern.permute.xlu0 0
        %1961 = vperm.xlu0 %1960, %v490
        %v1962 = vpop.permute.xlu0 %1961
        %1965 = vset.pattern.permute.xlu0 0
        %1966 = vperm.xlu0 %1965, %v491
        %v1967 = vpop.permute.xlu0 %1966
        %1970 = vset.pattern.permute.xlu0 0
        %1971 = vperm.xlu0 %1970, %v492
        %v1972 = vpop.permute.xlu0 %1971
        %1975 = vset.pattern.permute.xlu0 0
        %1976 = vperm.xlu0 %1975, %v493
        %v1977 = vpop.permute.xlu0 %1976
        %1980 = vset.pattern.permute.xlu0 0
        %1981 = vperm.xlu0 %1980, %v494
        %v1982 = vpop.permute.xlu0 %1981
        %1985 = vset.pattern.permute.xlu0 0
        %1986 = vperm.xlu0 %1985, %v495
        %v1987 = vpop.permute.xlu0 %1986
        %1990 = vset.pattern.permute.xlu0 0
        %1991 = vperm.xlu0 %1990, %v496
        %v1992 = vpop.permute.xlu0 %1991
        %1995 = vset.pattern.permute.xlu0 0
        %1996 = vperm.xlu0 %1995, %v497
        %v1997 = vpop.permute.xlu0 %1996
        %2000 = vset.pattern.permute.xlu0 0
        %2001 = vperm.xlu0 %2000, %v498
        %v2002 = vpop.permute.xlu0 %2001
        %2005 = vset.pattern.permute.xlu0 0
        %2006 = vperm.xlu0 %2005, %v499
        %v2007 = vpop.permute.xlu0 %2006
        %2010 = vset.pattern.permute.xlu0 0
        %2011 = vperm.xlu0 %2010, %v500
        %v2012 = vpop.permute.xlu0 %2011
        %2015 = vset.pattern.permute.xlu0 0
        %2016 = vperm.xlu0 %2015, %v501
        %v2017 = vpop.permute.xlu0 %2016
        %2020 = vset.pattern.permute.xlu0 0
        %2021 = vperm.xlu0 %2020, %v502
        %v2022 = vpop.permute.xlu0 %2021
        %2025 = vset.pattern.permute.xlu0 0
        %2026 = vperm.xlu0 %2025, %v503
        %v2027 = vpop.permute.xlu0 %2026
        %2030 = vset.pattern.permute.xlu0 0
        %2031 = vperm.xlu0 %2030, %v504
        %v2032 = vpop.permute.xlu0 %2031
        %2035 = vset.pattern.permute.xlu0 0
        %2036 = vperm.xlu0 %2035, %v505
        %v2037 = vpop.permute.xlu0 %2036
        %2040 = vset.pattern.permute.xlu0 0
        %2041 = vperm.xlu0 %2040, %v506
        %v2042 = vpop.permute.xlu0 %2041
        %2045 = vset.pattern.permute.xlu0 0
        %2046 = vperm.xlu0 %2045, %v507
        %v2047 = vpop.permute.xlu0 %2046
        %2050 = vset.pattern.permute.xlu0 0
        %2051 = vperm.xlu0 %2050, %v508
        %v2052 = vpop.permute.xlu0 %2051
        %v2054 = vmul.f32 %v902, %v1937
        %v2055 = vmul.f32 %v903, %v1942
        %v2056 = vmul.f32 %v904, %v1947
        %v2057 = vmul.f32 %v905, %v1952
        %v2058 = vmul.f32 %v906, %v1957
        %v2059 = vmul.f32 %v907, %v1962
        %v2060 = vmul.f32 %v908, %v1967
        %v2061 = vmul.f32 %v909, %v1972
        %v2062 = vmul.f32 %v910, %v1977
        %v2063 = vmul.f32 %v911, %v1982
        %v2064 = vmul.f32 %v912, %v1987
        %v2065 = vmul.f32 %v913, %v1992
        %v2066 = vmul.f32 %v914, %v1997
        %v2067 = vmul.f32 %v915, %v2002
        %v2068 = vmul.f32 %v916, %v2007
        %v2069 = vmul.f32 %v917, %v2012
        %v2070 = vmul.f32 %v918, %v2017
        %v2071 = vmul.f32 %v919, %v2022
        %v2072 = vmul.f32 %v920, %v2027
        %v2073 = vmul.f32 %v921, %v2032
        %v2074 = vmul.f32 %v922, %v2037
        %v2075 = vmul.f32 %v923, %v2042
        %v2076 = vmul.f32 %v924, %v2047
        %v2077 = vmul.f32 %v925, %v2052
        %v2078 = vmul.f32 %v2054, %v1910
        %v2079 = vmul.f32 %v2055, %v1911
        %v2080 = vmul.f32 %v2056, %v1912
        %v2081 = vmul.f32 %v2057, %v1913
        %v2082 = vmul.f32 %v2058, %v1914
        %v2083 = vmul.f32 %v2059, %v1915
        %v2084 = vmul.f32 %v2060, %v1916
        %v2085 = vmul.f32 %v2061, %v1917
        %v2086 = vmul.f32 %v2062, %v1918
        %v2087 = vmul.f32 %v2063, %v1919
        %v2088 = vmul.f32 %v2064, %v1920
        %v2089 = vmul.f32 %v2065, %v1921
        %v2090 = vmul.f32 %v2066, %v1922
        %v2091 = vmul.f32 %v2067, %v1923
        %v2092 = vmul.f32 %v2068, %v1924
        %v2093 = vmul.f32 %v2069, %v1925
        %v2094 = vmul.f32 %v2070, %v1926
        %v2095 = vmul.f32 %v2071, %v1927
        %v2096 = vmul.f32 %v2072, %v1928
        %v2097 = vmul.f32 %v2073, %v1929
        %v2098 = vmul.f32 %v2074, %v1930
        %v2099 = vmul.f32 %v2075, %v1931
        %v2100 = vmul.f32 %v2076, %v1932
        %v2101 = vmul.f32 %v2077, %v1933
        %2103 = vset.pattern.permute.xlu0 0
        %2104 = vperm.xlu0 %2103, %v461
        %v2105 = vpop.permute.xlu0 %2104
        %2108 = vset.pattern.permute.xlu0 0
        %2109 = vperm.xlu0 %2108, %v462
        %v2110 = vpop.permute.xlu0 %2109
        %2113 = vset.pattern.permute.xlu0 0
        %2114 = vperm.xlu0 %2113, %v463
        %v2115 = vpop.permute.xlu0 %2114
        %2118 = vset.pattern.permute.xlu0 0
        %2119 = vperm.xlu0 %2118, %v464
        %v2120 = vpop.permute.xlu0 %2119
        %2123 = vset.pattern.permute.xlu0 0
        %2124 = vperm.xlu0 %2123, %v465
        %v2125 = vpop.permute.xlu0 %2124
        %2128 = vset.pattern.permute.xlu0 0
        %2129 = vperm.xlu0 %2128, %v466
        %v2130 = vpop.permute.xlu0 %2129
        %2133 = vset.pattern.permute.xlu0 0
        %2134 = vperm.xlu0 %2133, %v467
        %v2135 = vpop.permute.xlu0 %2134
        %2138 = vset.pattern.permute.xlu0 0
        %2139 = vperm.xlu0 %2138, %v468
        %v2140 = vpop.permute.xlu0 %2139
        %2143 = vset.pattern.permute.xlu0 0
        %2144 = vperm.xlu0 %2143, %v469
        %v2145 = vpop.permute.xlu0 %2144
        %2148 = vset.pattern.permute.xlu0 0
        %2149 = vperm.xlu0 %2148, %v470
        %v2150 = vpop.permute.xlu0 %2149
        %2153 = vset.pattern.permute.xlu0 0
        %2154 = vperm.xlu0 %2153, %v471
        %v2155 = vpop.permute.xlu0 %2154
        %2158 = vset.pattern.permute.xlu0 0
        %2159 = vperm.xlu0 %2158, %v472
        %v2160 = vpop.permute.xlu0 %2159
        %2163 = vset.pattern.permute.xlu0 0
        %2164 = vperm.xlu0 %2163, %v473
        %v2165 = vpop.permute.xlu0 %2164
        %2168 = vset.pattern.permute.xlu0 0
        %2169 = vperm.xlu0 %2168, %v474
        %v2170 = vpop.permute.xlu0 %2169
        %2173 = vset.pattern.permute.xlu0 0
        %2174 = vperm.xlu0 %2173, %v475
        %v2175 = vpop.permute.xlu0 %2174
        %2178 = vset.pattern.permute.xlu0 0
        %2179 = vperm.xlu0 %2178, %v476
        %v2180 = vpop.permute.xlu0 %2179
        %2183 = vset.pattern.permute.xlu0 0
        %2184 = vperm.xlu0 %2183, %v477
        %v2185 = vpop.permute.xlu0 %2184
        %2188 = vset.pattern.permute.xlu0 0
        %2189 = vperm.xlu0 %2188, %v478
        %v2190 = vpop.permute.xlu0 %2189
        %2193 = vset.pattern.permute.xlu0 0
        %2194 = vperm.xlu0 %2193, %v479
        %v2195 = vpop.permute.xlu0 %2194
        %2198 = vset.pattern.permute.xlu0 0
        %2199 = vperm.xlu0 %2198, %v480
        %v2200 = vpop.permute.xlu0 %2199
        %2203 = vset.pattern.permute.xlu0 0
        %2204 = vperm.xlu0 %2203, %v481
        %v2205 = vpop.permute.xlu0 %2204
        %2208 = vset.pattern.permute.xlu0 0
        %2209 = vperm.xlu0 %2208, %v482
        %v2210 = vpop.permute.xlu0 %2209
        %2213 = vset.pattern.permute.xlu0 0
        %2214 = vperm.xlu0 %2213, %v483
        %v2215 = vpop.permute.xlu0 %2214
        %2218 = vset.pattern.permute.xlu0 0
        %2219 = vperm.xlu0 %2218, %v484
        %v2220 = vpop.permute.xlu0 %2219
        %v2222 = vsub.f32 %v2105, %v541
        %v2223 = vsub.f32 %v2110, %v541
        %v2224 = vsub.f32 %v2115, %v541
        %v2225 = vsub.f32 %v2120, %v541
        %v2226 = vsub.f32 %v2125, %v541
        %v2227 = vsub.f32 %v2130, %v541
        %v2228 = vsub.f32 %v2135, %v541
        %v2229 = vsub.f32 %v2140, %v541
        %v2230 = vsub.f32 %v2145, %v541
        %v2231 = vsub.f32 %v2150, %v541
        %v2232 = vsub.f32 %v2155, %v541
        %v2233 = vsub.f32 %v2160, %v541
        %v2234 = vsub.f32 %v2165, %v541
        %v2235 = vsub.f32 %v2170, %v541
        %v2236 = vsub.f32 %v2175, %v541
        %v2237 = vsub.f32 %v2180, %v541
        %v2238 = vsub.f32 %v2185, %v541
        %v2239 = vsub.f32 %v2190, %v541
        %v2240 = vsub.f32 %v2195, %v541
        %v2241 = vsub.f32 %v2200, %v541
        %v2242 = vsub.f32 %v2205, %v541
        %v2243 = vsub.f32 %v2210, %v541
        %v2244 = vsub.f32 %v2215, %v541
        %v2245 = vsub.f32 %v2220, %v541
        %2247 = vset.pattern.permute.xlu0 0
        %2248 = vperm.xlu0 %2247, %v509
        %v2249 = vpop.permute.xlu0 %2248
        %2252 = vset.pattern.permute.xlu0 0
        %2253 = vperm.xlu0 %2252, %v510
        %v2254 = vpop.permute.xlu0 %2253
        %2257 = vset.pattern.permute.xlu0 0
        %2258 = vperm.xlu0 %2257, %v511
        %v2259 = vpop.permute.xlu0 %2258
        %2262 = vset.pattern.permute.xlu0 0
        %2263 = vperm.xlu0 %2262, %v512
        %v2264 = vpop.permute.xlu0 %2263
        %2267 = vset.pattern.permute.xlu0 0
        %2268 = vperm.xlu0 %2267, %v513
        %v2269 = vpop.permute.xlu0 %2268
        %2272 = vset.pattern.permute.xlu0 0
        %2273 = vperm.xlu0 %2272, %v514
        %v2274 = vpop.permute.xlu0 %2273
        %2277 = vset.pattern.permute.xlu0 0
        %2278 = vperm.xlu0 %2277, %v515
        %v2279 = vpop.permute.xlu0 %2278
        %2282 = vset.pattern.permute.xlu0 0
        %2283 = vperm.xlu0 %2282, %v516
        %v2284 = vpop.permute.xlu0 %2283
        %2287 = vset.pattern.permute.xlu0 0
        %2288 = vperm.xlu0 %2287, %v517
        %v2289 = vpop.permute.xlu0 %2288
        %2292 = vset.pattern.permute.xlu0 0
        %2293 = vperm.xlu0 %2292, %v518
        %v2294 = vpop.permute.xlu0 %2293
        %2297 = vset.pattern.permute.xlu0 0
        %2298 = vperm.xlu0 %2297, %v519
        %v2299 = vpop.permute.xlu0 %2298
        %2302 = vset.pattern.permute.xlu0 0
        %2303 = vperm.xlu0 %2302, %v520
        %v2304 = vpop.permute.xlu0 %2303
        %2307 = vset.pattern.permute.xlu0 0
        %2308 = vperm.xlu0 %2307, %v521
        %v2309 = vpop.permute.xlu0 %2308
        %2312 = vset.pattern.permute.xlu0 0
        %2313 = vperm.xlu0 %2312, %v522
        %v2314 = vpop.permute.xlu0 %2313
        %2317 = vset.pattern.permute.xlu0 0
        %2318 = vperm.xlu0 %2317, %v523
        %v2319 = vpop.permute.xlu0 %2318
        %2322 = vset.pattern.permute.xlu0 0
        %2323 = vperm.xlu0 %2322, %v524
        %v2324 = vpop.permute.xlu0 %2323
        %2327 = vset.pattern.permute.xlu0 0
        %2328 = vperm.xlu0 %2327, %v525
        %v2329 = vpop.permute.xlu0 %2328
        %2332 = vset.pattern.permute.xlu0 0
        %2333 = vperm.xlu0 %2332, %v526
        %v2334 = vpop.permute.xlu0 %2333
        %2337 = vset.pattern.permute.xlu0 0
        %2338 = vperm.xlu0 %2337, %v527
        %v2339 = vpop.permute.xlu0 %2338
        %2342 = vset.pattern.permute.xlu0 0
        %2343 = vperm.xlu0 %2342, %v528
        %v2344 = vpop.permute.xlu0 %2343
        %2347 = vset.pattern.permute.xlu0 0
        %2348 = vperm.xlu0 %2347, %v529
        %v2349 = vpop.permute.xlu0 %2348
        %2352 = vset.pattern.permute.xlu0 0
        %2353 = vperm.xlu0 %2352, %v530
        %v2354 = vpop.permute.xlu0 %2353
        %2357 = vset.pattern.permute.xlu0 0
        %2358 = vperm.xlu0 %2357, %v531
        %v2359 = vpop.permute.xlu0 %2358
        %2362 = vset.pattern.permute.xlu0 0
        %2363 = vperm.xlu0 %2362, %v532
        %v2364 = vpop.permute.xlu0 %2363
        %v2366 = vmul.f32 %v2222, %v2249
        %v2367 = vmul.f32 %v2223, %v2254
        %v2368 = vmul.f32 %v2224, %v2259
        %v2369 = vmul.f32 %v2225, %v2264
        %v2370 = vmul.f32 %v2226, %v2269
        %v2371 = vmul.f32 %v2227, %v2274
        %v2372 = vmul.f32 %v2228, %v2279
        %v2373 = vmul.f32 %v2229, %v2284
        %v2374 = vmul.f32 %v2230, %v2289
        %v2375 = vmul.f32 %v2231, %v2294
        %v2376 = vmul.f32 %v2232, %v2299
        %v2377 = vmul.f32 %v2233, %v2304
        %v2378 = vmul.f32 %v2234, %v2309
        %v2379 = vmul.f32 %v2235, %v2314
        %v2380 = vmul.f32 %v2236, %v2319
        %v2381 = vmul.f32 %v2237, %v2324
        %v2382 = vmul.f32 %v2238, %v2329
        %v2383 = vmul.f32 %v2239, %v2334
        %v2384 = vmul.f32 %v2240, %v2339
        %v2385 = vmul.f32 %v2241, %v2344
        %v2386 = vmul.f32 %v2242, %v2349
        %v2387 = vmul.f32 %v2243, %v2354
        %v2388 = vmul.f32 %v2244, %v2359
        %v2389 = vmul.f32 %v2245, %v2364
        %v2390 = vmul.f32 %v2366, %v1911
        %v2391 = vmul.f32 %v2367, %v1912
        %v2392 = vmul.f32 %v2368, %v1913
        %v2393 = vmul.f32 %v2369, %v1914
        %v2394 = vmul.f32 %v2370, %v1915
        %v2395 = vmul.f32 %v2371, %v1916
        %v2396 = vmul.f32 %v2372, %v1917
        %v2397 = vmul.f32 %v2373, %v1918
        %v2398 = vmul.f32 %v2374, %v1919
        %v2399 = vmul.f32 %v2375, %v1920
        %v2400 = vmul.f32 %v2376, %v1921
        %v2401 = vmul.f32 %v2377, %v1922
        %v2402 = vmul.f32 %v2378, %v1923
        %v2403 = vmul.f32 %v2379, %v1924
        %v2404 = vmul.f32 %v2380, %v1925
        %v2405 = vmul.f32 %v2381, %v1926
        %v2406 = vmul.f32 %v2382, %v1927
        %v2407 = vmul.f32 %v2383, %v1928
        %v2408 = vmul.f32 %v2384, %v1929
        %v2409 = vmul.f32 %v2385, %v1930
        %v2410 = vmul.f32 %v2386, %v1931
        %v2411 = vmul.f32 %v2387, %v1932
        %v2412 = vmul.f32 %v2388, %v1933
        %v2413 = vmul.f32 %v2389, 0.0
        %v2414 = vadd.f32 %v2078, %v2390
        %v2415 = vadd.f32 %v2079, %v2391
        %v2416 = vadd.f32 %v2080, %v2392
        %v2417 = vadd.f32 %v2081, %v2393
        %v2418 = vadd.f32 %v2082, %v2394
        %v2419 = vadd.f32 %v2083, %v2395
        %v2420 = vadd.f32 %v2084, %v2396
        %v2421 = vadd.f32 %v2085, %v2397
        %v2422 = vadd.f32 %v2086, %v2398
        %v2423 = vadd.f32 %v2087, %v2399
        %v2424 = vadd.f32 %v2088, %v2400
        %v2425 = vadd.f32 %v2089, %v2401
        %v2426 = vadd.f32 %v2090, %v2402
        %v2427 = vadd.f32 %v2091, %v2403
        %v2428 = vadd.f32 %v2092, %v2404
        %v2429 = vadd.f32 %v2093, %v2405
        %v2430 = vadd.f32 %v2094, %v2406
        %v2431 = vadd.f32 %v2095, %v2407
        %v2432 = vadd.f32 %v2096, %v2408
        %v2433 = vadd.f32 %v2097, %v2409
        %v2434 = vadd.f32 %v2098, %v2410
        %v2435 = vadd.f32 %v2099, %v2411
        %v2436 = vadd.f32 %v2100, %v2412
        %v2437 = vadd.f32 %v2101, %v2413
        %v2438 = vld [vmem:[%s263] sm:$0xff]
        %v2439 = vld [vmem:[%s263 + $0x8] sm:$0xff]
        %v2440 = vld [vmem:[%s263 + $0x10] sm:$0xff]
        %v2441 = vld [vmem:[%s263 + $0x18] sm:$0xff]
        %v2442 = vld [vmem:[%s263 + $0x20] sm:$0xff]
        %v2443 = vld [vmem:[%s263 + $0x28] sm:$0xff]
        %v2444 = vld [vmem:[%s263 + $0x30] sm:$0xff]
        %v2445 = vld [vmem:[%s263 + $0x38] sm:$0xff]
        %v2446 = vld [vmem:[%s263 + $0x40] sm:$0xff]
        %v2447 = vld [vmem:[%s263 + $0x48] sm:$0xff]
        %v2448 = vld [vmem:[%s263 + $0x50] sm:$0xff]
        %v2449 = vld [vmem:[%s263 + $0x58] sm:$0xff]
        %v2450 = vld [vmem:[%s263 + $0x60] sm:$0xff]
        %v2451 = vld [vmem:[%s263 + $0x68] sm:$0xff]
        %v2452 = vld [vmem:[%s263 + $0x70] sm:$0xff]
        %v2453 = vld [vmem:[%s263 + $0x78] sm:$0xff]
        %vm2454 = vcmask 523264
        %v2456 = vsel %vm2454, %v2439, 0
        %v2459 = vsel %vm2454, %v2441, 0
        %v2462 = vsel %vm2454, %v2443, 0
        %v2465 = vsel %vm2454, %v2445, 0
        %v2468 = vsel %vm2454, %v2447, 0
        %v2471 = vsel %vm2454, %v2449, 0
        %v2474 = vsel %vm2454, %v2451, 0
        %v2477 = vsel %vm2454, %v2453, 0
        %2479 = vmatprep.subr.mxu0 0.0
        %2480 = vmatpush1.msra.mxu0 %v2414
        %2481 = vmatprep.subr.mxu0 0.0
        %2482 = vmatpush1.msra.mxu0 %v2415
        %2483 = vmatprep.subr.mxu0 0.0
        %2484 = vmatpush1.msra.mxu0 %v2416
        %2485 = vmatprep.subr.mxu0 0.0
        %2486 = vmatpush1.msra.mxu0 %v2417
        %2487 = vmatprep.subr.mxu0 0.0
        %2488 = vmatpush1.msra.mxu0 %v2418
        %2489 = vmatprep.subr.mxu0 0.0
        %2490 = vmatpush1.msra.mxu0 %v2419
        %2491 = vmatprep.subr.mxu0 0.0
        %2492 = vmatpush1.msra.mxu0 %v2420
        %2493 = vmatprep.subr.mxu0 0.0
        %2494 = vmatpush1.msra.mxu0 %v2421
        %2495 = vmatprep.subr.mxu0 0.0
        %2496 = vmatpush1.msra.mxu0 %v2422
        %2497 = vmatprep.subr.mxu0 0.0
        %2498 = vmatpush1.msra.mxu0 %v2423
        %2499 = vmatprep.subr.mxu0 0.0
        %2500 = vmatpush1.msra.mxu0 %v2424
        %2501 = vmatprep.subr.mxu0 0.0
        %2502 = vmatpush1.msra.mxu0 %v2425
        %2503 = vmatprep.subr.mxu0 0.0
        %2504 = vmatpush1.msra.mxu0 %v2426
        %2505 = vmatprep.subr.mxu0 0.0
        %2506 = vmatpush1.msra.mxu0 %v2427
        %2507 = vmatprep.subr.mxu0 0.0
        %2508 = vmatpush1.msra.mxu0 %v2428
        %2509 = vmatprep.subr.mxu0 0.0
        %2510 = vmatpush1.msra.mxu0 %v2429
        %2511 = vmatprep.subr.mxu0 0.0
        %2512 = vmatpush1.msra.mxu0 %v2430
        %2513 = vmatprep.subr.mxu0 0.0
        %2514 = vmatpush1.msra.mxu0 %v2431
        %2515 = vmatprep.subr.mxu0 0.0
        %2516 = vmatpush1.msra.mxu0 %v2432
        %2517 = vmatprep.subr.mxu0 0.0
        %2518 = vmatpush1.msra.mxu0 %v2433
        %2519 = vmatprep.subr.mxu0 0.0
        %2520 = vmatpush1.msra.mxu0 %v2434
        %2521 = vmatprep.subr.mxu0 0.0
        %2522 = vmatpush1.msra.mxu0 %v2435
        %2523 = vmatprep.subr.mxu0 0.0
        %2524 = vmatpush1.msra.mxu0 %v2436
        %2525 = vmatprep.subr.mxu0 0.0
        %2526 = vmatpush1.msra.mxu0 %v2437
        %2527 = vmatprep.subr.mxu0 0.0
        %2528 = vmatpush1.msra.mxu0 0.0
        %2529 = vmatprep.subr.mxu0 0.0
        %2530 = vmatpush1.msra.mxu0 0.0
        %2531 = vmatprep.subr.mxu0 0.0
        %2532 = vmatpush1.msra.mxu0 0.0
        %2533 = vmatprep.subr.mxu0 0.0
        %2534 = vmatpush1.msra.mxu0 0.0
        %2535 = vmatprep.subr.mxu0 0.0
        %2536 = vmatpush1.msra.mxu0 0.0
        %2537 = vmatprep.subr.mxu0 0.0
        %2538 = vmatpush1.msra.mxu0 0.0
        %2539 = vmatprep.subr.mxu0 0.0
        %2540 = vmatpush1.msra.mxu0 0.0
        %2541 = vmatprep.subr.mxu0 0.0
        %2542 = vmatpush1.msra.mxu0 0.0
        %2543 = vmatprep.mubr.f32.mxu0 %v2456
        %2544 = vmatmul.mubr.f32.gmra.mrb[0].mxu0 %v2438
        %v2545 = vpop.f32.mrb[0].mxu0
        %v2546 = vadd.f32 0.0, %v2545
        %v2547 = vpop.f32.mrb[0].mxu0
        %2548 = vmatprep.mubr.f32.mxu0 %v2459
        %2549 = vmatmul.mubr.f32.gmra.mrb[0].mxu0 %v2440
        %v2550 = vpop.f32.mrb[0].mxu0
        %v2551 = vadd.f32 0.0, %v2550
        %v2552 = vpop.f32.mrb[0].mxu0
        %2553 = vmatprep.mubr.f32.mxu0 %v2462
        %2554 = vmatmul.mubr.f32.gmra.mrb[0].mxu0 %v2442
        %v2555 = vpop.f32.mrb[0].mxu0
        %v2556 = vadd.f32 0.0, %v2555
        %v2557 = vpop.f32.mrb[0].mxu0
        %2558 = vmatprep.mubr.f32.mxu0 %v2465
        %2559 = vmatmul.mubr.f32.gmra.mrb[0].mxu0 %v2444
        %v2560 = vpop.f32.mrb[0].mxu0
        %v2561 = vadd.f32 0.0, %v2560
        %v2562 = vpop.f32.mrb[0].mxu0
        %2563 = vmatprep.mubr.f32.mxu0 %v2468
        %2564 = vmatmul.mubr.f32.gmra.mrb[0].mxu0 %v2446
        %v2565 = vpop.f32.mrb[0].mxu0
        %v2566 = vadd.f32 0.0, %v2565
        %v2567 = vpop.f32.mrb[0].mxu0
        %2568 = vmatprep.mubr.f32.mxu0 %v2471
        %2569 = vmatmul.mubr.f32.gmra.mrb[0].mxu0 %v2448
        %v2570 = vpop.f32.mrb[0].mxu0
        %v2571 = vadd.f32 0.0, %v2570
        %v2572 = vpop.f32.mrb[0].mxu0
        %2573 = vmatprep.mubr.f32.mxu0 %v2474
        %2574 = vmatmul.mubr.f32.gmra.mrb[0].mxu0 %v2450
        %v2575 = vpop.f32.mrb[0].mxu0
        %v2576 = vadd.f32 0.0, %v2575
        %v2577 = vpop.f32.mrb[0].mxu0
        %2578 = vmatprep.mubr.f32.mxu0 %v2477
        %2579 = vmatmul.mubr.f32.gmra.mrb[0].mxu0 %v2452
        %v2580 = vpop.f32.mrb[0].mxu0
        %v2581 = vadd.f32 0.0, %v2580
        %v2582 = vpop.f32.mrb[0].mxu0
        %2583 = vdwg.mxu0
        %2584 = vst [vmem:[%s239] sm:$0xff] %v2546
        %2585 = vst [vmem:[%s239 + $0x8] sm:$0xff] %v2551
        %2586 = vst [vmem:[%s239 + $0x10] sm:$0xff] %v2556
        %2587 = vst [vmem:[%s239 + $0x18] sm:$0xff] %v2561
        %2588 = vst [vmem:[%s239 + $0x20] sm:$0xff] %v2566
        %2589 = vst [vmem:[%s239 + $0x28] sm:$0xff] %v2571
        %2590 = vst [vmem:[%s239 + $0x30] sm:$0xff] %v2576
        %2591 = vst [vmem:[%s239 + $0x38] sm:$0xff] %v2581
        %2593 = vset.pattern.permute.xlu0 0
        %2594 = vperm.xlu0 %2593, %v533
        %v2595 = vpop.permute.xlu0 %2594
        %2598 = vset.pattern.permute.xlu0 0
        %2599 = vperm.xlu0 %2598, %v534
        %v2600 = vpop.permute.xlu0 %2599
        %2603 = vset.pattern.permute.xlu0 0
        %2604 = vperm.xlu0 %2603, %v535
        %v2605 = vpop.permute.xlu0 %2604
        %2608 = vset.pattern.permute.xlu0 0
        %2609 = vperm.xlu0 %2608, %v536
        %v2610 = vpop.permute.xlu0 %2609
        %2613 = vset.pattern.permute.xlu0 0
        %2614 = vperm.xlu0 %2613, %v537
        %v2615 = vpop.permute.xlu0 %2614
        %2618 = vset.pattern.permute.xlu0 0
        %2619 = vperm.xlu0 %2618, %v538
        %v2620 = vpop.permute.xlu0 %2619
        %2623 = vset.pattern.permute.xlu0 0
        %2624 = vperm.xlu0 %2623, %v539
        %v2625 = vpop.permute.xlu0 %2624
        %2628 = vset.pattern.permute.xlu0 0
        %2629 = vperm.xlu0 %2628, %v540
        %v2630 = vpop.permute.xlu0 %2629
        %v2632 = vmul.f32 %v2546, %v2595
        %v2633 = vmul.f32 %v2551, %v2600
        %v2634 = vmul.f32 %v2556, %v2605
        %v2635 = vmul.f32 %v2561, %v2610
        %v2636 = vmul.f32 %v2566, %v2615
        %v2637 = vmul.f32 %v2571, %v2620
        %v2638 = vmul.f32 %v2576, %v2625
        %v2639 = vmul.f32 %v2581, %v2630
        %v2640 = vadd.f32 %v2632, %v2633
        %v2641 = vadd.f32 %v2640, %v2634
        %v2642 = vadd.f32 %v2641, %v2635
        %v2643 = vadd.f32 %v2642, %v2636
        %v2644 = vadd.f32 %v2643, %v2637
        %v2645 = vadd.f32 %v2644, %v2638
        %v2646 = vadd.f32 %v2645, %v2639
        %p2647 = scmp.eq.s32.totalorder %s21, 0
        // Predicated region
        $region33: #{kan_layer_forward.1} parent=31 // pred_check
          %p2648 = pneg %p2647
        $region34: #{kan_layer_forward.1} parent=31 // pred_check_branch
          %2650 = sbr.rel (%p2648) target = $region36
        $region35: #{kan_layer_forward.1} parent=31 // pred_region
          %2651 = vst [vmem:[%s268] sm:$0xff] 0.0
        $region36: #{kan_layer_forward.1} parent=31 // pred_fallthru
          _
        %v2652 = vld [vmem:[%s268] sm:$0xff]
        %v2653 = vadd.f32 %v2652, %v2646
        %2654 = vst [vmem:[%s268] sm:$0xff] %v2653
        %s2655 = sand.u32 %s118, 1
        %s2656 = sand.u32 %s118, 1
        %s2657 = smul.addr %s2656, 64
        %s2658 = scalar_lea.vmem [#allocation2], %s2657
        %p2659 = scmp.lt.s32.totalorder %s20, 1
        %s2660 = scalar_select %p2659, %s20, 1
        %s2661 = smul.addr %s2660, 8
        %s2662 = scalar_lea.vmem %s4, %s2661
        // Predicated region
        $region37: #{kan_layer_forward.1} parent=31 // pred_check
          %p2663 = pneg %p128
        $region38: #{kan_layer_forward.1} parent=31 // pred_check_branch
          %2665 = sbr.rel (%p2663) target = $region40
        $region39: #{kan_layer_forward.1} parent=31 // pred_region
          %s2666 = smul.u32 8, %s21
          %s2667 = smul.addr %s2666, 2
          %s2668 = sadd.s32 %s20, %s2667
          %s2669 = smul.addr %s2668, 8
          %s2670 = scalar_lea.vmem %s3, %s2669
          // Predicated region
          $region41: #{kan_layer_forward.1} parent=39 // pred_check
            _
          $region42: #{kan_layer_forward.1} parent=39 // pred_check_branch
            %2672 = sbr.rel (0) target = $region44
          $region43: #{kan_layer_forward.1} parent=39 // pred_region
            // Predicated region
            $region45: #{kan_layer_forward.1} parent=43 // pred_check
              _
            $region46: #{kan_layer_forward.1} parent=43 // pred_check_branch
              %2674 = sbr.rel (0) target = $region48
            $region47: #{kan_layer_forward.1} parent=43 // pred_region
              // Predicated region
              $region60: #{kan_layer_forward.1} parent=47 // pred_check
                _
              $region61: #{kan_layer_forward.1} parent=47 // pred_check_branch
                %2703 = sbr.rel (0) target = $region63
              $region62: #{kan_layer_forward.1} parent=47 // pred_region
                loop: start=0, step=1, limit=1
                $region64: #{kan_layer_forward.1} parent=62 // loop_pre_header
                  _
                $region65: #{kan_layer_forward.1} parent=62 // loop_header
                  %s2705 = sphi 0, %s2709
                  %p2706 = scmp.ge.s32.totalorder %s2705, 1
                  %s2710 = sphi %s2658, %s2658
                  %s2711 = sphi %s2670, %s2670
                $region66: #{kan_layer_forward.1} parent=62 // loop_header_branch
                  %2708 = sbr.rel (%p2706) target = $region70
                $region67: #{kan_layer_forward.1} parent=62 // loop_body
                  %v2712 = vld [vmem:[%s2710] sm:$0xff]
                  %2713 = vst [vmem:[%s2711] sm:$0xff] %v2712
                  %v2714 = vld [vmem:[%s2710 + $0x8] sm:$0xff]
                  %2715 = vst [vmem:[%s2711 + $0x10] sm:$0xff] %v2714
                  %v2716 = vld [vmem:[%s2710 + $0x10] sm:$0xff]
                  %2717 = vst [vmem:[%s2711 + $0x20] sm:$0xff] %v2716
                  %v2718 = vld [vmem:[%s2710 + $0x18] sm:$0xff]
                  %2719 = vst [vmem:[%s2711 + $0x30] sm:$0xff] %v2718
                  %v2720 = vld [vmem:[%s2710 + $0x20] sm:$0xff]
                  %2721 = vst [vmem:[%s2711 + $0x40] sm:$0xff] %v2720
                  %v2722 = vld [vmem:[%s2710 + $0x28] sm:$0xff]
                  %2723 = vst [vmem:[%s2711 + $0x50] sm:$0xff] %v2722
                  %v2724 = vld [vmem:[%s2710 + $0x30] sm:$0xff]
                  %2725 = vst [vmem:[%s2711 + $0x60] sm:$0xff] %v2724
                  %v2726 = vld [vmem:[%s2710 + $0x38] sm:$0xff]
                  %2727 = vst [vmem:[%s2711 + $0x70] sm:$0xff] %v2726
                $region68: #{kan_layer_forward.1} parent=62 // loop_footer
                  %s2709 = sadd.s32 1, %s2705
                $region69: #{kan_layer_forward.1} parent=62 // loop_footer_branch
                  %2704 = sbr.rel target = $region65
                $region70: #{kan_layer_forward.1} parent=62 // loop_exit
                  _
              $region63: #{kan_layer_forward.1} parent=47 // pred_fallthru
                _
              // Predicated region
              $region71: #{kan_layer_forward.1} parent=47 // pred_check
                _
              $region72: #{kan_layer_forward.1} parent=47 // pred_check_branch
                %2729 = sbr.rel target = $region74
              $region73: #{kan_layer_forward.1} parent=47 // pred_region
                _
              $region74: #{kan_layer_forward.1} parent=47 // pred_fallthru
                _
            $region48: #{kan_layer_forward.1} parent=43 // pred_fallthru
              _
            // Predicated region
            $region49: #{kan_layer_forward.1} parent=43 // pred_check
              _
            $region50: #{kan_layer_forward.1} parent=43 // pred_check_branch
              %2676 = sbr.rel target = $region52
            $region51: #{kan_layer_forward.1} parent=43 // pred_region
              loop: start=0, step=1, limit=1
              $region53: #{kan_layer_forward.1} parent=51 // loop_pre_header
                _
              $region54: #{kan_layer_forward.1} parent=51 // loop_header
                %s2679 = sphi 0, %s2683
                %p2680 = scmp.ge.s32.totalorder %s2679, 1
                %s2684 = sphi %s2658, %s2658
                %s2685 = sphi %s2670, %s2670
              $region55: #{kan_layer_forward.1} parent=51 // loop_header_branch
                %2682 = sbr.rel (%p2680) target = $region59
              $region56: #{kan_layer_forward.1} parent=51 // loop_body
                %v2686 = vld [vmem:[%s2684] sm:$0xff]
                %2687 = vst [vmem:[%s2685] sm:$0xff] %v2686
                %v2688 = vld [vmem:[%s2684 + $0x8] sm:$0xff]
                %2689 = vst [vmem:[%s2685 + $0x10] sm:$0xff] %v2688
                %v2690 = vld [vmem:[%s2684 + $0x10] sm:$0xff]
                %2691 = vst [vmem:[%s2685 + $0x20] sm:$0xff] %v2690
                %v2692 = vld [vmem:[%s2684 + $0x18] sm:$0xff]
                %2693 = vst [vmem:[%s2685 + $0x30] sm:$0xff] %v2692
                %v2694 = vld [vmem:[%s2684 + $0x20] sm:$0xff]
                %2695 = vst [vmem:[%s2685 + $0x40] sm:$0xff] %v2694
                %v2696 = vld [vmem:[%s2684 + $0x28] sm:$0xff]
                %2697 = vst [vmem:[%s2685 + $0x50] sm:$0xff] %v2696
                %v2698 = vld [vmem:[%s2684 + $0x30] sm:$0xff]
                %2699 = vst [vmem:[%s2685 + $0x60] sm:$0xff] %v2698
                %v2700 = vld [vmem:[%s2684 + $0x38] sm:$0xff]
                %2701 = vst [vmem:[%s2685 + $0x70] sm:$0xff] %v2700
              $region57: #{kan_layer_forward.1} parent=51 // loop_footer
                %s2683 = sadd.s32 1, %s2679
              $region58: #{kan_layer_forward.1} parent=51 // loop_footer_branch
                %2678 = sbr.rel target = $region54
              $region59: #{kan_layer_forward.1} parent=51 // loop_exit
                _
            $region52: #{kan_layer_forward.1} parent=43 // pred_fallthru
              _
          $region44: #{kan_layer_forward.1} parent=39 // pred_fallthru
            _
          %2730 = vnop
        $region40: #{kan_layer_forward.1} parent=31 // pred_fallthru
          _
        // Predicated region
        $region75: #{kan_layer_forward.1} parent=31 // pred_check
          %p2731 = pneg %p154
        $region76: #{kan_layer_forward.1} parent=31 // pred_check_branch
          %2733 = sbr.rel (%p2731) target = $region78
        $region77: #{kan_layer_forward.1} parent=31 // pred_region
          _
        $region78: #{kan_layer_forward.1} parent=31 // pred_fallthru
          _
      $region32: #{kan_layer_forward.1} parent=5 // pred_fallthru
        _
      %p2734 = scmp.le.s32.totalorder 2, %s11
      // Predicated region
      $region79: #{kan_layer_forward.1} parent=5 // pred_check
        %p2735 = pneg %p2734
      $region80: #{kan_layer_forward.1} parent=5 // pred_check_branch
        %2737 = sbr.rel (%p2735) target = $region82
      $region81: #{kan_layer_forward.1} parent=5 // pred_region
        %s2738 = ssub.s32 %s11, 2
        // Predicated region
        $region83: #{kan_layer_forward.1} parent=81 // pred_check
          %p2739 = pneg %p134
        $region84: #{kan_layer_forward.1} parent=81 // pred_check_branch
          %2741 = sbr.rel (%p2739) target = $region86
        $region85: #{kan_layer_forward.1} parent=81 // pred_region
          %s2742 = sand.u32 %s119, 1
          %s2743 = sand.u32 %s119, 1
          %s2744 = smul.addr %s2743, 64
          %s2745 = scalar_lea.vmem [#allocation2], %s2744
        $region86: #{kan_layer_forward.1} parent=81 // pred_fallthru
          _
        // Predicated region
        $region87: #{kan_layer_forward.1} parent=81 // pred_check
          %p2746 = pneg %p160
        $region88: #{kan_layer_forward.1} parent=81 // pred_check_branch
          %2748 = sbr.rel (%p2746) target = $region90
        $region89: #{kan_layer_forward.1} parent=81 // pred_region
          %p2749 = scmp.lt.s32.totalorder %s22, 1
          %s2750 = scalar_select %p2749, %s22, 1
          %s2751 = smul.addr %s2750, 8
          %s2752 = scalar_lea.vmem %s4, %s2751
        $region90: #{kan_layer_forward.1} parent=81 // pred_fallthru
          _
      $region82: #{kan_layer_forward.1} parent=5 // pred_fallthru
        _
    $region6: #{kan_layer_forward.1} parent=1 // loop_footer
      %s15 = sadd.s32 1, %s11
    $region7: #{kan_layer_forward.1} parent=1 // loop_footer_branch
      %10 = sbr.rel target = $region3
    $region8: #{kan_layer_forward.1} parent=1 // loop_exit
      _

</llo_original>
